<compile_context>
chip_gen: v6e
topology: v6e:2x2x1
jax: 0.10.0
libtpu: 0.0.40
codegen_flags: <defaults>
</compile_context>

<pallas_src>
import functools

import jax
import jax.numpy as jnp
import numpy as np
from jax.experimental import pallas as pl
from jax.experimental.pallas import tpu as pltpu


# -----------------------------------------------------------------------------
# Fused kernel: [LSTM layer]*num_layers + Linear head, everything in VMEM /
# registers.  x is consumed in native (B, T, D) layout; rows are b-major.
# -----------------------------------------------------------------------------
def _make_fused_kernel(num_layers, seq_len, batch, hidden, out_size):
    T, B, H = seq_len, batch, hidden

    def kernel(*refs):
        x_ref = refs[0]
        lyr_refs = refs[1:1 + 3 * num_layers]          # (wih_t, whh_t, b) per layer
        wfc_ref = refs[1 + 3 * num_layers]             # (H, O)
        bfc_ref = refs[2 + 3 * num_layers]             # (1, O)
        out_ref = refs[3 + 3 * num_layers]             # (B, T, O)

        # (B, T, D) -> (B*T, D); row = b*T + t.  Tile-boundary merge (T == 8).
        src = x_ref[...].reshape(B * T, x_ref.shape[-1])

        for l in range(num_layers):
            wih = lyr_refs[3 * l + 0][...]             # (in, 4H)  i/f/o cols pre-scaled 0.5
            whh = lyr_refs[3 * l + 1][...]             # (H, 4H)   i/f/o cols pre-scaled 0.5
            b = lyr_refs[3 * l + 2][...]               # (1, 4H)   b_ih+b_hh, pre-scaled

            # Hoisted input projection over ALL T*B rows (one batched matmul).
            gx = jnp.dot(src, wih, preferred_element_type=jnp.float32) + b   # (B*T, 4H)
            gx3 = gx.reshape(B, T, 4 * H)              # tile-boundary split, free

            # Serial recurrence, statically unrolled (T is compile-time const).
            h = jnp.zeros((B, H), jnp.float32)
            c = jnp.zeros((B, H), jnp.float32)
            h_list = []
            for t in range(T):
                # gx3[:, t, :] is a static sublane extract, off the h->h chain.
                gates = gx3[:, t, :] + jnp.dot(
                    h, whh, preferred_element_type=jnp.float32)   # (B, 4H), half-scaled
                tg = jnp.tanh(gates)      # ONE EUP pass over all 4H gate columns
                # sigmoid(z) = 0.5*tanh(z/2) + 0.5  (weights already carry the /2)
                i_g = tg[:, 0 * H:1 * H] * 0.5 + 0.5
                f_g = tg[:, 1 * H:2 * H] * 0.5 + 0.5
                g_g = tg[:, 2 * H:3 * H]               # true tanh gate, full scale
                o_g = tg[:, 3 * H:4 * H] * 0.5 + 0.5
                c = f_g * c + i_g * g_g
                h = o_g * jnp.tanh(c)
                h_list.append(h)                       # stays in registers

            # (B, T, H) assembled once per layer, b-major rows for next matmul.
            src = jnp.stack(h_list, axis=1).reshape(B * T, H)

        # FC head: one batched matmul; single store, already in (B, T, O) order.
        out = jnp.dot(src, wfc_ref[...], preferred_element_type=jnp.float32) + bfc_ref[...]
        out_ref[...] = out.reshape(B, T, out_size)

    return kernel


# -----------------------------------------------------------------------------
# Param prep (hoisted off the forward path): transpose weights, pre-sum the two
# LSTM biases, and pre-scale the i/f/o gate columns by 0.5 for the tanh-fold.
# PyTorch gate column order is [i, f, g, o]; only the g block keeps full scale.
# -----------------------------------------------------------------------------
def prepare_params(params):
    prep = {"layers": [], "fc": {}}
    for layer in params["lstm"]:
        H = layer["w_hh"].shape[1]
        col_scale = np.full((1, 4 * H), 0.5, np.float32)
        col_scale[:, 2 * H:3 * H] = 1.0                 # g gate: no fold
        col_scale = jnp.asarray(col_scale)
        prep["layers"].append({
            "wih_t": jnp.transpose(layer["w_ih"]) * col_scale,           # (in, 4H)
            "whh_t": jnp.transpose(layer["w_hh"]) * col_scale,           # (H, 4H)
            "b": (layer["b_ih"] + layer["b_hh"]).reshape(1, -1) * col_scale,  # (1, 4H)
        })
    prep["fc"]["w_t"] = jnp.transpose(params["fc"]["w"])                 # (H, O)
    prep["fc"]["b"] = params["fc"]["b"].reshape(1, -1)                   # (1, O)
    return prep


# -----------------------------------------------------------------------------
# Full model: x (B, T, D) -> (B, T, O), matches LSTMModel.forward.
# No wrapper-side transposes/reshapes: the kernel handles layout internally.
# -----------------------------------------------------------------------------
def lstm_model(x_btd, prep):
    B, T, D = x_btd.shape
    H = prep["layers"][0]["whh_t"].shape[0]
    O = prep["fc"]["w_t"].shape[1]
    num_layers = len(prep["layers"])

    kernel = _make_fused_kernel(num_layers, T, B, H, O)

    in_specs = [pl.BlockSpec((B, T, D), lambda: (0, 0, 0))]
    operands = [x_btd]
    for lyr in prep["layers"]:
        in_dim = lyr["wih_t"].shape[0]
        in_specs += [
            pl.BlockSpec((in_dim, 4 * H), lambda: (0, 0)),
            pl.BlockSpec((H, 4 * H), lambda: (0, 0)),
            pl.BlockSpec((1, 4 * H), lambda: (0, 0)),
        ]
        operands += [lyr["wih_t"], lyr["whh_t"], lyr["b"]]
    in_specs += [
        pl.BlockSpec((H, O), lambda: (0, 0)),
        pl.BlockSpec((1, O), lambda: (0, 0)),
    ]
    operands += [prep["fc"]["w_t"], prep["fc"]["b"]]

    return pl.pallas_call(
        kernel,
        out_shape=jax.ShapeDtypeStruct((B, T, O), jnp.float32),
        in_specs=in_specs,
        out_specs=pl.BlockSpec((B, T, O), lambda: (0, 0, 0)),
    )(*operands)


# -----------------------------------------------------------------------------
# Deterministic parameter init (PyTorch-style uniform(-1/sqrt(H), 1/sqrt(H)))
# -----------------------------------------------------------------------------
def init_params(key, input_size, hidden_size, output_size, num_layers):
    k = 1.0 / np.sqrt(hidden_size)
    params = {"lstm": [], "fc": {}}
    for layer in range(num_layers):
        in_sz = input_size if layer == 0 else hidden_size
        key, k1, k2, k3, k4 = jax.random.split(key, 5)
        params["lstm"].append({
            "w_ih": jax.random.uniform(k1, (4 * hidden_size, in_sz), jnp.float32, -k, k),
            "w_hh": jax.random.uniform(k2, (4 * hidden_size, hidden_size), jnp.float32, -k, k),
            "b_ih": jax.random.uniform(k3, (4 * hidden_size,), jnp.float32, -k, k),
            "b_hh": jax.random.uniform(k4, (4 * hidden_size,), jnp.float32, -k, k),
        })
    key, k1, k2 = jax.random.split(key, 3)
    kf = 1.0 / np.sqrt(hidden_size)
    params["fc"]["w"] = jax.random.uniform(k1, (output_size, hidden_size), jnp.float32, -kf, kf)
    params["fc"]["b"] = jax.random.uniform(k2, (output_size,), jnp.float32, -kf, kf)
    return params


# -----------------------------------------------------------------------------
# Pure-JAX reference (for correctness check only)
# -----------------------------------------------------------------------------
def _ref_model(x_btd, params):
    h_seq = jnp.transpose(x_btd, (1, 0, 2))  # (T, B, D)
    for layer in params["lstm"]:
        H = layer["w_hh"].shape[1]
        B = h_seq.shape[1]

        def step(carry, x_t, layer=layer, H=H):
            h, c = carry
            gates = (x_t @ layer["w_ih"].T + layer["b_ih"]
                     + h @ layer["w_hh"].T + layer["b_hh"])
            i = jax.nn.sigmoid(gates[:, 0 * H:1 * H])
            f = jax.nn.sigmoid(gates[:, 1 * H:2 * H])
            g = jnp.tanh(gates[:, 2 * H:3 * H])
            o = jax.nn.sigmoid(gates[:, 3 * H:4 * H])
            c = f * c + i * g
            h = o * jnp.tanh(c)
            return (h, c), h

        init = (jnp.zeros((B, H), jnp.float32), jnp.zeros((B, H), jnp.float32))
        _, h_seq = jax.lax.scan(step, init, h_seq)
    out = h_seq @ params["fc"]["w"].T + params["fc"]["b"]
    return jnp.transpose(out, (1, 0, 2))


if __name__ == "__main__":
    batch = 2
    seq = 8
    input_size = 4
    hidden_size = 32
    output_size = 4
    num_layers = 2

    key = jax.random.PRNGKey(0)
    key, xkey = jax.random.split(key)
    x = jax.random.normal(xkey, (batch, seq, input_size), jnp.float32)

    params = init_params(key, input_size, hidden_size, output_size, num_layers)
    prep = prepare_params(params)   # hoisted once, off the forward path

    fwd = jax.jit(functools.partial(lstm_model, prep=prep))
    out = jax.block_until_ready(fwd(x))

    ref = _ref_model(x, params)
    assert out.shape == (batch, seq, output_size)
    np.testing.assert_allclose(np.asarray(out), np.asarray(ref), atol=1e-4, rtol=1e-4)

    print("KERNEL_OK")
</pallas_src>

<mosaic_0001>
module attributes {stable_mosaic.version = 11 : i64} {
  func.func @kernel(%arg0: memref<2x8x4xf32, #tpu.memory_space<vmem>>, %arg1: memref<4x128xf32, #tpu.memory_space<vmem>>, %arg2: memref<32x128xf32, #tpu.memory_space<vmem>>, %arg3: memref<1x128xf32, #tpu.memory_space<vmem>>, %arg4: memref<32x128xf32, #tpu.memory_space<vmem>>, %arg5: memref<32x128xf32, #tpu.memory_space<vmem>>, %arg6: memref<1x128xf32, #tpu.memory_space<vmem>>, %arg7: memref<32x4xf32, #tpu.memory_space<vmem>>, %arg8: memref<1x4xf32, #tpu.memory_space<vmem>>, %arg9: memref<2x8x4xf32, #tpu.memory_space<vmem>>) attributes {dimension_semantics = [], scalar_prefetch = 0 : i64, scratch_operands = 0 : i64, tpu.core_type = #tpu.core_type<tc>} {
    %c0 = arith.constant 0 : index
    %c0_0 = arith.constant 0 : index
    %c0_1 = arith.constant 0 : index
    %0 = vector.load %arg0[%c0, %c0_0, %c0_1] : memref<2x8x4xf32, #tpu.memory_space<vmem>>, vector<2x8x4xf32>
    %1 = vector.shape_cast %0 : vector<2x8x4xf32> to vector<16x4xf32>
    %c0_2 = arith.constant 0 : index
    %c0_3 = arith.constant 0 : index
    %2 = vector.load %arg1[%c0_2, %c0_3] : memref<4x128xf32, #tpu.memory_space<vmem>>, vector<4x128xf32>
    %c0_4 = arith.constant 0 : index
    %c0_5 = arith.constant 0 : index
    %3 = vector.load %arg2[%c0_4, %c0_5] : memref<32x128xf32, #tpu.memory_space<vmem>>, vector<32x128xf32>
    %c0_6 = arith.constant 0 : index
    %c0_7 = arith.constant 0 : index
    %4 = vector.load %arg3[%c0_6, %c0_7] : memref<1x128xf32, #tpu.memory_space<vmem>>, vector<1x128xf32>
    %cst = arith.constant dense<0.000000e+00> : vector<16x128xf32>
    %5 = tpu.matmul %1, %2, %cst {dimension_numbers = #tpu.dot_dimension_numbers<[1], [0], [0], [1], [0, 0, 1, 1], [], []>} : vector<16x4xf32>, vector<4x128xf32>, vector<16x128xf32> -> vector<16x128xf32>
    %6 = vector.broadcast %4 : vector<1x128xf32> to vector<16x128xf32>
    %7 = arith.addf %5, %6 : vector<16x128xf32>
    %8 = vector.shape_cast %7 : vector<16x128xf32> to vector<2x8x128xf32>
    %cst_8 = arith.constant 0.000000e+00 : f32
    %9 = vector.broadcast %cst_8 : f32 to vector<2x32xf32>
    %cst_9 = arith.constant 0.000000e+00 : f32
    %10 = vector.broadcast %cst_9 : f32 to vector<2x32xf32>
    %11 = vector.extract_strided_slice %8 {offsets = [0, 0, 0], sizes = [2, 1, 128], strides = [1, 1, 1]} : vector<2x8x128xf32> to vector<2x1x128xf32>
    %12 = vector.shape_cast %11 : vector<2x1x128xf32> to vector<2x128xf32>
    %cst_10 = arith.constant dense<0.000000e+00> : vector<2x128xf32>
    %13 = tpu.matmul %9, %3, %cst_10 {dimension_numbers = #tpu.dot_dimension_numbers<[1], [0], [0], [1], [0, 0, 1, 1], [], []>} : vector<2x32xf32>, vector<32x128xf32>, vector<2x128xf32> -> vector<2x128xf32>
    %14 = arith.addf %12, %13 : vector<2x128xf32>
    %15 = math.tanh %14 : vector<2x128xf32>
    %16 = vector.extract_strided_slice %15 {offsets = [0, 0], sizes = [2, 32], strides = [1, 1]} : vector<2x128xf32> to vector<2x32xf32>
    %cst_11 = arith.constant 5.000000e-01 : f32
    %17 = vector.broadcast %cst_11 : f32 to vector<2x32xf32>
    %18 = arith.mulf %16, %17 : vector<2x32xf32>
    %cst_12 = arith.constant 5.000000e-01 : f32
    %19 = vector.broadcast %cst_12 : f32 to vector<2x32xf32>
    %20 = arith.addf %18, %19 : vector<2x32xf32>
    %21 = vector.extract_strided_slice %15 {offsets = [0, 32], sizes = [2, 32], strides = [1, 1]} : vector<2x128xf32> to vector<2x32xf32>
    %cst_13 = arith.constant 5.000000e-01 : f32
    %22 = vector.broadcast %cst_13 : f32 to vector<2x32xf32>
    %23 = arith.mulf %21, %22 : vector<2x32xf32>
    %cst_14 = arith.constant 5.000000e-01 : f32
    %24 = vector.broadcast %cst_14 : f32 to vector<2x32xf32>
    %25 = arith.addf %23, %24 : vector<2x32xf32>
    %26 = vector.extract_strided_slice %15 {offsets = [0, 64], sizes = [2, 32], strides = [1, 1]} : vector<2x128xf32> to vector<2x32xf32>
    %27 = vector.extract_strided_slice %15 {offsets = [0, 96], sizes = [2, 32], strides = [1, 1]} : vector<2x128xf32> to vector<2x32xf32>
    %cst_15 = arith.constant 5.000000e-01 : f32
    %28 = vector.broadcast %cst_15 : f32 to vector<2x32xf32>
    %29 = arith.mulf %27, %28 : vector<2x32xf32>
    %cst_16 = arith.constant 5.000000e-01 : f32
    %30 = vector.broadcast %cst_16 : f32 to vector<2x32xf32>
    %31 = arith.addf %29, %30 : vector<2x32xf32>
    %32 = arith.mulf %25, %10 : vector<2x32xf32>
    %33 = arith.mulf %20, %26 : vector<2x32xf32>
    %34 = arith.addf %32, %33 : vector<2x32xf32>
    %35 = math.tanh %34 : vector<2x32xf32>
    %36 = arith.mulf %31, %35 : vector<2x32xf32>
    %37 = vector.extract_strided_slice %8 {offsets = [0, 1, 0], sizes = [2, 1, 128], strides = [1, 1, 1]} : vector<2x8x128xf32> to vector<2x1x128xf32>
    %38 = vector.shape_cast %37 : vector<2x1x128xf32> to vector<2x128xf32>
    %cst_17 = arith.constant dense<0.000000e+00> : vector<2x128xf32>
    %39 = tpu.matmul %36, %3, %cst_17 {dimension_numbers = #tpu.dot_dimension_numbers<[1], [0], [0], [1], [0, 0, 1, 1], [], []>} : vector<2x32xf32>, vector<32x128xf32>, vector<2x128xf32> -> vector<2x128xf32>
    %40 = arith.addf %38, %39 : vector<2x128xf32>
    %41 = math.tanh %40 : vector<2x128xf32>
    %42 = vector.extract_strided_slice %41 {offsets = [0, 0], sizes = [2, 32], strides = [1, 1]} : vector<2x128xf32> to vector<2x32xf32>
    %cst_18 = arith.constant 5.000000e-01 : f32
    %43 = vector.broadcast %cst_18 : f32 to vector<2x32xf32>
    %44 = arith.mulf %42, %43 : vector<2x32xf32>
    %cst_19 = arith.constant 5.000000e-01 : f32
    %45 = vector.broadcast %cst_19 : f32 to vector<2x32xf32>
    %46 = arith.addf %44, %45 : vector<2x32xf32>
    %47 = vector.extract_strided_slice %41 {offsets = [0, 32], sizes = [2, 32], strides = [1, 1]} : vector<2x128xf32> to vector<2x32xf32>
    %cst_20 = arith.constant 5.000000e-01 : f32
    %48 = vector.broadcast %cst_20 : f32 to vector<2x32xf32>
    %49 = arith.mulf %47, %48 : vector<2x32xf32>
    %cst_21 = arith.constant 5.000000e-01 : f32
    %50 = vector.broadcast %cst_21 : f32 to vector<2x32xf32>
    %51 = arith.addf %49, %50 : vector<2x32xf32>
    %52 = vector.extract_strided_slice %41 {offsets = [0, 64], sizes = [2, 32], strides = [1, 1]} : vector<2x128xf32> to vector<2x32xf32>
    %53 = vector.extract_strided_slice %41 {offsets = [0, 96], sizes = [2, 32], strides = [1, 1]} : vector<2x128xf32> to vector<2x32xf32>
    %cst_22 = arith.constant 5.000000e-01 : f32
    %54 = vector.broadcast %cst_22 : f32 to vector<2x32xf32>
    %55 = arith.mulf %53, %54 : vector<2x32xf32>
    %cst_23 = arith.constant 5.000000e-01 : f32
    %56 = vector.broadcast %cst_23 : f32 to vector<2x32xf32>
    %57 = arith.addf %55, %56 : vector<2x32xf32>
    %58 = arith.mulf %51, %34 : vector<2x32xf32>
    %59 = arith.mulf %46, %52 : vector<2x32xf32>
    %60 = arith.addf %58, %59 : vector<2x32xf32>
    %61 = math.tanh %60 : vector<2x32xf32>
    %62 = arith.mulf %57, %61 : vector<2x32xf32>
    %63 = vector.extract_strided_slice %8 {offsets = [0, 2, 0], sizes = [2, 1, 128], strides = [1, 1, 1]} : vector<2x8x128xf32> to vector<2x1x128xf32>
    %64 = vector.shape_cast %63 : vector<2x1x128xf32> to vector<2x128xf32>
    %cst_24 = arith.constant dense<0.000000e+00> : vector<2x128xf32>
    %65 = tpu.matmul %62, %3, %cst_24 {dimension_numbers = #tpu.dot_dimension_numbers<[1], [0], [0], [1], [0, 0, 1, 1], [], []>} : vector<2x32xf32>, vector<32x128xf32>, vector<2x128xf32> -> vector<2x128xf32>
    %66 = arith.addf %64, %65 : vector<2x128xf32>
    %67 = math.tanh %66 : vector<2x128xf32>
    %68 = vector.extract_strided_slice %67 {offsets = [0, 0], sizes = [2, 32], strides = [1, 1]} : vector<2x128xf32> to vector<2x32xf32>
    %cst_25 = arith.constant 5.000000e-01 : f32
    %69 = vector.broadcast %cst_25 : f32 to vector<2x32xf32>
    %70 = arith.mulf %68, %69 : vector<2x32xf32>
    %cst_26 = arith.constant 5.000000e-01 : f32
    %71 = vector.broadcast %cst_26 : f32 to vector<2x32xf32>
    %72 = arith.addf %70, %71 : vector<2x32xf32>
    %73 = vector.extract_strided_slice %67 {offsets = [0, 32], sizes = [2, 32], strides = [1, 1]} : vector<2x128xf32> to vector<2x32xf32>
    %cst_27 = arith.constant 5.000000e-01 : f32
    %74 = vector.broadcast %cst_27 : f32 to vector<2x32xf32>
    %75 = arith.mulf %73, %74 : vector<2x32xf32>
    %cst_28 = arith.constant 5.000000e-01 : f32
    %76 = vector.broadcast %cst_28 : f32 to vector<2x32xf32>
    %77 = arith.addf %75, %76 : vector<2x32xf32>
    %78 = vector.extract_strided_slice %67 {offsets = [0, 64], sizes = [2, 32], strides = [1, 1]} : vector<2x128xf32> to vector<2x32xf32>
    %79 = vector.extract_strided_slice %67 {offsets = [0, 96], sizes = [2, 32], strides = [1, 1]} : vector<2x128xf32> to vector<2x32xf32>
    %cst_29 = arith.constant 5.000000e-01 : f32
    %80 = vector.broadcast %cst_29 : f32 to vector<2x32xf32>
    %81 = arith.mulf %79, %80 : vector<2x32xf32>
    %cst_30 = arith.constant 5.000000e-01 : f32
    %82 = vector.broadcast %cst_30 : f32 to vector<2x32xf32>
    %83 = arith.addf %81, %82 : vector<2x32xf32>
    %84 = arith.mulf %77, %60 : vector<2x32xf32>
    %85 = arith.mulf %72, %78 : vector<2x32xf32>
    %86 = arith.addf %84, %85 : vector<2x32xf32>
    %87 = math.tanh %86 : vector<2x32xf32>
    %88 = arith.mulf %83, %87 : vector<2x32xf32>
    %89 = vector.extract_strided_slice %8 {offsets = [0, 3, 0], sizes = [2, 1, 128], strides = [1, 1, 1]} : vector<2x8x128xf32> to vector<2x1x128xf32>
    %90 = vector.shape_cast %89 : vector<2x1x128xf32> to vector<2x128xf32>
    %cst_31 = arith.constant dense<0.000000e+00> : vector<2x128xf32>
    %91 = tpu.matmul %88, %3, %cst_31 {dimension_numbers = #tpu.dot_dimension_numbers<[1], [0], [0], [1], [0, 0, 1, 1], [], []>} : vector<2x32xf32>, vector<32x128xf32>, vector<2x128xf32> -> vector<2x128xf32>
    %92 = arith.addf %90, %91 : vector<2x128xf32>
    %93 = math.tanh %92 : vector<2x128xf32>
    %94 = vector.extract_strided_slice %93 {offsets = [0, 0], sizes = [2, 32], strides = [1, 1]} : vector<2x128xf32> to vector<2x32xf32>
    %cst_32 = arith.constant 5.000000e-01 : f32
    %95 = vector.broadcast %cst_32 : f32 to vector<2x32xf32>
    %96 = arith.mulf %94, %95 : vector<2x32xf32>
    %cst_33 = arith.constant 5.000000e-01 : f32
    %97 = vector.broadcast %cst_33 : f32 to vector<2x32xf32>
    %98 = arith.addf %96, %97 : vector<2x32xf32>
    %99 = vector.extract_strided_slice %93 {offsets = [0, 32], sizes = [2, 32], strides = [1, 1]} : vector<2x128xf32> to vector<2x32xf32>
    %cst_34 = arith.constant 5.000000e-01 : f32
    %100 = vector.broadcast %cst_34 : f32 to vector<2x32xf32>
    %101 = arith.mulf %99, %100 : vector<2x32xf32>
    %cst_35 = arith.constant 5.000000e-01 : f32
    %102 = vector.broadcast %cst_35 : f32 to vector<2x32xf32>
    %103 = arith.addf %101, %102 : vector<2x32xf32>
    %104 = vector.extract_strided_slice %93 {offsets = [0, 64], sizes = [2, 32], strides = [1, 1]} : vector<2x128xf32> to vector<2x32xf32>
    %105 = vector.extract_strided_slice %93 {offsets = [0, 96], sizes = [2, 32], strides = [1, 1]} : vector<2x128xf32> to vector<2x32xf32>
    %cst_36 = arith.constant 5.000000e-01 : f32
    %106 = vector.broadcast %cst_36 : f32 to vector<2x32xf32>
    %107 = arith.mulf %105, %106 : vector<2x32xf32>
    %cst_37 = arith.constant 5.000000e-01 : f32
    %108 = vector.broadcast %cst_37 : f32 to vector<2x32xf32>
    %109 = arith.addf %107, %108 : vector<2x32xf32>
    %110 = arith.mulf %103, %86 : vector<2x32xf32>
    %111 = arith.mulf %98, %104 : vector<2x32xf32>
    %112 = arith.addf %110, %111 : vector<2x32xf32>
    %113 = math.tanh %112 : vector<2x32xf32>
    %114 = arith.mulf %109, %113 : vector<2x32xf32>
    %115 = vector.extract_strided_slice %8 {offsets = [0, 4, 0], sizes = [2, 1, 128], strides = [1, 1, 1]} : vector<2x8x128xf32> to vector<2x1x128xf32>
    %116 = vector.shape_cast %115 : vector<2x1x128xf32> to vector<2x128xf32>
    %cst_38 = arith.constant dense<0.000000e+00> : vector<2x128xf32>
    %117 = tpu.matmul %114, %3, %cst_38 {dimension_numbers = #tpu.dot_dimension_numbers<[1], [0], [0], [1], [0, 0, 1, 1], [], []>} : vector<2x32xf32>, vector<32x128xf32>, vector<2x128xf32> -> vector<2x128xf32>
    %118 = arith.addf %116, %117 : vector<2x128xf32>
    %119 = math.tanh %118 : vector<2x128xf32>
    %120 = vector.extract_strided_slice %119 {offsets = [0, 0], sizes = [2, 32], strides = [1, 1]} : vector<2x128xf32> to vector<2x32xf32>
    %cst_39 = arith.constant 5.000000e-01 : f32
    %121 = vector.broadcast %cst_39 : f32 to vector<2x32xf32>
    %122 = arith.mulf %120, %121 : vector<2x32xf32>
    %cst_40 = arith.constant 5.000000e-01 : f32
    %123 = vector.broadcast %cst_40 : f32 to vector<2x32xf32>
    %124 = arith.addf %122, %123 : vector<2x32xf32>
    %125 = vector.extract_strided_slice %119 {offsets = [0, 32], sizes = [2, 32], strides = [1, 1]} : vector<2x128xf32> to vector<2x32xf32>
    %cst_41 = arith.constant 5.000000e-01 : f32
    %126 = vector.broadcast %cst_41 : f32 to vector<2x32xf32>
    %127 = arith.mulf %125, %126 : vector<2x32xf32>
    %cst_42 = arith.constant 5.000000e-01 : f32
    %128 = vector.broadcast %cst_42 : f32 to vector<2x32xf32>
    %129 = arith.addf %127, %128 : vector<2x32xf32>
    %130 = vector.extract_strided_slice %119 {offsets = [0, 64], sizes = [2, 32], strides = [1, 1]} : vector<2x128xf32> to vector<2x32xf32>
    %131 = vector.extract_strided_slice %119 {offsets = [0, 96], sizes = [2, 32], strides = [1, 1]} : vector<2x128xf32> to vector<2x32xf32>
    %cst_43 = arith.constant 5.000000e-01 : f32
    %132 = vector.broadcast %cst_43 : f32 to vector<2x32xf32>
    %133 = arith.mulf %131, %132 : vector<2x32xf32>
    %cst_44 = arith.constant 5.000000e-01 : f32
    %134 = vector.broadcast %cst_44 : f32 to vector<2x32xf32>
    %135 = arith.addf %133, %134 : vector<2x32xf32>
    %136 = arith.mulf %129, %112 : vector<2x32xf32>
    %137 = arith.mulf %124, %130 : vector<2x32xf32>
    %138 = arith.addf %136, %137 : vector<2x32xf32>
    %139 = math.tanh %138 : vector<2x32xf32>
    %140 = arith.mulf %135, %139 : vector<2x32xf32>
    %141 = vector.extract_strided_slice %8 {offsets = [0, 5, 0], sizes = [2, 1, 128], strides = [1, 1, 1]} : vector<2x8x128xf32> to vector<2x1x128xf32>
    %142 = vector.shape_cast %141 : vector<2x1x128xf32> to vector<2x128xf32>
    %cst_45 = arith.constant dense<0.000000e+00> : vector<2x128xf32>
    %143 = tpu.matmul %140, %3, %cst_45 {dimension_numbers = #tpu.dot_dimension_numbers<[1], [0], [0], [1], [0, 0, 1, 1], [], []>} : vector<2x32xf32>, vector<32x128xf32>, vector<2x128xf32> -> vector<2x128xf32>
    %144 = arith.addf %142, %143 : vector<2x128xf32>
    %145 = math.tanh %144 : vector<2x128xf32>
    %146 = vector.extract_strided_slice %145 {offsets = [0, 0], sizes = [2, 32], strides = [1, 1]} : vector<2x128xf32> to vector<2x32xf32>
    %cst_46 = arith.constant 5.000000e-01 : f32
    %147 = vector.broadcast %cst_46 : f32 to vector<2x32xf32>
    %148 = arith.mulf %146, %147 : vector<2x32xf32>
    %cst_47 = arith.constant 5.000000e-01 : f32
    %149 = vector.broadcast %cst_47 : f32 to vector<2x32xf32>
    %150 = arith.addf %148, %149 : vector<2x32xf32>
    %151 = vector.extract_strided_slice %145 {offsets = [0, 32], sizes = [2, 32], strides = [1, 1]} : vector<2x128xf32> to vector<2x32xf32>
    %cst_48 = arith.constant 5.000000e-01 : f32
    %152 = vector.broadcast %cst_48 : f32 to vector<2x32xf32>
    %153 = arith.mulf %151, %152 : vector<2x32xf32>
    %cst_49 = arith.constant 5.000000e-01 : f32
    %154 = vector.broadcast %cst_49 : f32 to vector<2x32xf32>
    %155 = arith.addf %153, %154 : vector<2x32xf32>
    %156 = vector.extract_strided_slice %145 {offsets = [0, 64], sizes = [2, 32], strides = [1, 1]} : vector<2x128xf32> to vector<2x32xf32>
    %157 = vector.extract_strided_slice %145 {offsets = [0, 96], sizes = [2, 32], strides = [1, 1]} : vector<2x128xf32> to vector<2x32xf32>
    %cst_50 = arith.constant 5.000000e-01 : f32
    %158 = vector.broadcast %cst_50 : f32 to vector<2x32xf32>
    %159 = arith.mulf %157, %158 : vector<2x32xf32>
    %cst_51 = arith.constant 5.000000e-01 : f32
    %160 = vector.broadcast %cst_51 : f32 to vector<2x32xf32>
    %161 = arith.addf %159, %160 : vector<2x32xf32>
    %162 = arith.mulf %155, %138 : vector<2x32xf32>
    %163 = arith.mulf %150, %156 : vector<2x32xf32>
    %164 = arith.addf %162, %163 : vector<2x32xf32>
    %165 = math.tanh %164 : vector<2x32xf32>
    %166 = arith.mulf %161, %165 : vector<2x32xf32>
    %167 = vector.extract_strided_slice %8 {offsets = [0, 6, 0], sizes = [2, 1, 128], strides = [1, 1, 1]} : vector<2x8x128xf32> to vector<2x1x128xf32>
    %168 = vector.shape_cast %167 : vector<2x1x128xf32> to vector<2x128xf32>
    %cst_52 = arith.constant dense<0.000000e+00> : vector<2x128xf32>
    %169 = tpu.matmul %166, %3, %cst_52 {dimension_numbers = #tpu.dot_dimension_numbers<[1], [0], [0], [1], [0, 0, 1, 1], [], []>} : vector<2x32xf32>, vector<32x128xf32>, vector<2x128xf32> -> vector<2x128xf32>
    %170 = arith.addf %168, %169 : vector<2x128xf32>
    %171 = math.tanh %170 : vector<2x128xf32>
    %172 = vector.extract_strided_slice %171 {offsets = [0, 0], sizes = [2, 32], strides = [1, 1]} : vector<2x128xf32> to vector<2x32xf32>
    %cst_53 = arith.constant 5.000000e-01 : f32
    %173 = vector.broadcast %cst_53 : f32 to vector<2x32xf32>
    %174 = arith.mulf %172, %173 : vector<2x32xf32>
    %cst_54 = arith.constant 5.000000e-01 : f32
    %175 = vector.broadcast %cst_54 : f32 to vector<2x32xf32>
    %176 = arith.addf %174, %175 : vector<2x32xf32>
    %177 = vector.extract_strided_slice %171 {offsets = [0, 32], sizes = [2, 32], strides = [1, 1]} : vector<2x128xf32> to vector<2x32xf32>
    %cst_55 = arith.constant 5.000000e-01 : f32
    %178 = vector.broadcast %cst_55 : f32 to vector<2x32xf32>
    %179 = arith.mulf %177, %178 : vector<2x32xf32>
    %cst_56 = arith.constant 5.000000e-01 : f32
    %180 = vector.broadcast %cst_56 : f32 to vector<2x32xf32>
    %181 = arith.addf %179, %180 : vector<2x32xf32>
    %182 = vector.extract_strided_slice %171 {offsets = [0, 64], sizes = [2, 32], strides = [1, 1]} : vector<2x128xf32> to vector<2x32xf32>
    %183 = vector.extract_strided_slice %171 {offsets = [0, 96], sizes = [2, 32], strides = [1, 1]} : vector<2x128xf32> to vector<2x32xf32>
    %cst_57 = arith.constant 5.000000e-01 : f32
    %184 = vector.broadcast %cst_57 : f32 to vector<2x32xf32>
    %185 = arith.mulf %183, %184 : vector<2x32xf32>
    %cst_58 = arith.constant 5.000000e-01 : f32
    %186 = vector.broadcast %cst_58 : f32 to vector<2x32xf32>
    %187 = arith.addf %185, %186 : vector<2x32xf32>
    %188 = arith.mulf %181, %164 : vector<2x32xf32>
    %189 = arith.mulf %176, %182 : vector<2x32xf32>
    %190 = arith.addf %188, %189 : vector<2x32xf32>
    %191 = math.tanh %190 : vector<2x32xf32>
    %192 = arith.mulf %187, %191 : vector<2x32xf32>
    %193 = vector.extract_strided_slice %8 {offsets = [0, 7, 0], sizes = [2, 1, 128], strides = [1, 1, 1]} : vector<2x8x128xf32> to vector<2x1x128xf32>
    %194 = vector.shape_cast %193 : vector<2x1x128xf32> to vector<2x128xf32>
    %cst_59 = arith.constant dense<0.000000e+00> : vector<2x128xf32>
    %195 = tpu.matmul %192, %3, %cst_59 {dimension_numbers = #tpu.dot_dimension_numbers<[1], [0], [0], [1], [0, 0, 1, 1], [], []>} : vector<2x32xf32>, vector<32x128xf32>, vector<2x128xf32> -> vector<2x128xf32>
    %196 = arith.addf %194, %195 : vector<2x128xf32>
    %197 = math.tanh %196 : vector<2x128xf32>
    %198 = vector.extract_strided_slice %197 {offsets = [0, 0], sizes = [2, 32], strides = [1, 1]} : vector<2x128xf32> to vector<2x32xf32>
    %cst_60 = arith.constant 5.000000e-01 : f32
    %199 = vector.broadcast %cst_60 : f32 to vector<2x32xf32>
    %200 = arith.mulf %198, %199 : vector<2x32xf32>
    %cst_61 = arith.constant 5.000000e-01 : f32
    %201 = vector.broadcast %cst_61 : f32 to vector<2x32xf32>
    %202 = arith.addf %200, %201 : vector<2x32xf32>
    %203 = vector.extract_strided_slice %197 {offsets = [0, 32], sizes = [2, 32], strides = [1, 1]} : vector<2x128xf32> to vector<2x32xf32>
    %cst_62 = arith.constant 5.000000e-01 : f32
    %204 = vector.broadcast %cst_62 : f32 to vector<2x32xf32>
    %205 = arith.mulf %203, %204 : vector<2x32xf32>
    %cst_63 = arith.constant 5.000000e-01 : f32
    %206 = vector.broadcast %cst_63 : f32 to vector<2x32xf32>
    %207 = arith.addf %205, %206 : vector<2x32xf32>
    %208 = vector.extract_strided_slice %197 {offsets = [0, 64], sizes = [2, 32], strides = [1, 1]} : vector<2x128xf32> to vector<2x32xf32>
    %209 = vector.extract_strided_slice %197 {offsets = [0, 96], sizes = [2, 32], strides = [1, 1]} : vector<2x128xf32> to vector<2x32xf32>
    %cst_64 = arith.constant 5.000000e-01 : f32
    %210 = vector.broadcast %cst_64 : f32 to vector<2x32xf32>
    %211 = arith.mulf %209, %210 : vector<2x32xf32>
    %cst_65 = arith.constant 5.000000e-01 : f32
    %212 = vector.broadcast %cst_65 : f32 to vector<2x32xf32>
    %213 = arith.addf %211, %212 : vector<2x32xf32>
    %214 = arith.mulf %207, %190 : vector<2x32xf32>
    %215 = arith.mulf %202, %208 : vector<2x32xf32>
    %216 = arith.addf %214, %215 : vector<2x32xf32>
    %217 = math.tanh %216 : vector<2x32xf32>
    %218 = arith.mulf %213, %217 : vector<2x32xf32>
    %219 = vector.shape_cast %36 : vector<2x32xf32> to vector<2x1x32xf32>
    %220 = vector.shape_cast %62 : vector<2x32xf32> to vector<2x1x32xf32>
    %221 = vector.shape_cast %88 : vector<2x32xf32> to vector<2x1x32xf32>
    %222 = vector.shape_cast %114 : vector<2x32xf32> to vector<2x1x32xf32>
    %223 = vector.shape_cast %140 : vector<2x32xf32> to vector<2x1x32xf32>
    %224 = vector.shape_cast %166 : vector<2x32xf32> to vector<2x1x32xf32>
    %225 = vector.shape_cast %192 : vector<2x32xf32> to vector<2x1x32xf32>
    %226 = vector.shape_cast %218 : vector<2x32xf32> to vector<2x1x32xf32>
    %227 = tpu.concatenate %219, %220, %221, %222, %223, %224, %225, %226 in 1 : vector<2x1x32xf32>, vector<2x1x32xf32>, vector<2x1x32xf32>, vector<2x1x32xf32>, vector<2x1x32xf32>, vector<2x1x32xf32>, vector<2x1x32xf32>, vector<2x1x32xf32> -> vector<2x8x32xf32>
    %228 = vector.shape_cast %227 : vector<2x8x32xf32> to vector<16x32xf32>
    %c0_66 = arith.constant 0 : index
    %c0_67 = arith.constant 0 : index
    %229 = vector.load %arg4[%c0_66, %c0_67] : memref<32x128xf32, #tpu.memory_space<vmem>>, vector<32x128xf32>
    %c0_68 = arith.constant 0 : index
    %c0_69 = arith.constant 0 : index
    %230 = vector.load %arg5[%c0_68, %c0_69] : memref<32x128xf32, #tpu.memory_space<vmem>>, vector<32x128xf32>
    %c0_70 = arith.constant 0 : index
    %c0_71 = arith.constant 0 : index
    %231 = vector.load %arg6[%c0_70, %c0_71] : memref<1x128xf32, #tpu.memory_space<vmem>>, vector<1x128xf32>
    %cst_72 = arith.constant dense<0.000000e+00> : vector<16x128xf32>
    %232 = tpu.matmul %228, %229, %cst_72 {dimension_numbers = #tpu.dot_dimension_numbers<[1], [0], [0], [1], [0, 0, 1, 1], [], []>} : vector<16x32xf32>, vector<32x128xf32>, vector<16x128xf32> -> vector<16x128xf32>
    %233 = vector.broadcast %231 : vector<1x128xf32> to vector<16x128xf32>
    %234 = arith.addf %232, %233 : vector<16x128xf32>
    %235 = vector.shape_cast %234 : vector<16x128xf32> to vector<2x8x128xf32>
    %cst_73 = arith.constant 0.000000e+00 : f32
    %236 = vector.broadcast %cst_73 : f32 to vector<2x32xf32>
    %cst_74 = arith.constant 0.000000e+00 : f32
    %237 = vector.broadcast %cst_74 : f32 to vector<2x32xf32>
    %238 = vector.extract_strided_slice %235 {offsets = [0, 0, 0], sizes = [2, 1, 128], strides = [1, 1, 1]} : vector<2x8x128xf32> to vector<2x1x128xf32>
    %239 = vector.shape_cast %238 : vector<2x1x128xf32> to vector<2x128xf32>
    %cst_75 = arith.constant dense<0.000000e+00> : vector<2x128xf32>
    %240 = tpu.matmul %236, %230, %cst_75 {dimension_numbers = #tpu.dot_dimension_numbers<[1], [0], [0], [1], [0, 0, 1, 1], [], []>} : vector<2x32xf32>, vector<32x128xf32>, vector<2x128xf32> -> vector<2x128xf32>
    %241 = arith.addf %239, %240 : vector<2x128xf32>
    %242 = math.tanh %241 : vector<2x128xf32>
    %243 = vector.extract_strided_slice %242 {offsets = [0, 0], sizes = [2, 32], strides = [1, 1]} : vector<2x128xf32> to vector<2x32xf32>
    %cst_76 = arith.constant 5.000000e-01 : f32
    %244 = vector.broadcast %cst_76 : f32 to vector<2x32xf32>
    %245 = arith.mulf %243, %244 : vector<2x32xf32>
    %cst_77 = arith.constant 5.000000e-01 : f32
    %246 = vector.broadcast %cst_77 : f32 to vector<2x32xf32>
    %247 = arith.addf %245, %246 : vector<2x32xf32>
    %248 = vector.extract_strided_slice %242 {offsets = [0, 32], sizes = [2, 32], strides = [1, 1]} : vector<2x128xf32> to vector<2x32xf32>
    %cst_78 = arith.constant 5.000000e-01 : f32
    %249 = vector.broadcast %cst_78 : f32 to vector<2x32xf32>
    %250 = arith.mulf %248, %249 : vector<2x32xf32>
    %cst_79 = arith.constant 5.000000e-01 : f32
    %251 = vector.broadcast %cst_79 : f32 to vector<2x32xf32>
    %252 = arith.addf %250, %251 : vector<2x32xf32>
    %253 = vector.extract_strided_slice %242 {offsets = [0, 64], sizes = [2, 32], strides = [1, 1]} : vector<2x128xf32> to vector<2x32xf32>
    %254 = vector.extract_strided_slice %242 {offsets = [0, 96], sizes = [2, 32], strides = [1, 1]} : vector<2x128xf32> to vector<2x32xf32>
    %cst_80 = arith.constant 5.000000e-01 : f32
    %255 = vector.broadcast %cst_80 : f32 to vector<2x32xf32>
    %256 = arith.mulf %254, %255 : vector<2x32xf32>
    %cst_81 = arith.constant 5.000000e-01 : f32
    %257 = vector.broadcast %cst_81 : f32 to vector<2x32xf32>
    %258 = arith.addf %256, %257 : vector<2x32xf32>
    %259 = arith.mulf %252, %237 : vector<2x32xf32>
    %260 = arith.mulf %247, %253 : vector<2x32xf32>
    %261 = arith.addf %259, %260 : vector<2x32xf32>
    %262 = math.tanh %261 : vector<2x32xf32>
    %263 = arith.mulf %258, %262 : vector<2x32xf32>
    %264 = vector.extract_strided_slice %235 {offsets = [0, 1, 0], sizes = [2, 1, 128], strides = [1, 1, 1]} : vector<2x8x128xf32> to vector<2x1x128xf32>
    %265 = vector.shape_cast %264 : vector<2x1x128xf32> to vector<2x128xf32>
    %cst_82 = arith.constant dense<0.000000e+00> : vector<2x128xf32>
    %266 = tpu.matmul %263, %230, %cst_82 {dimension_numbers = #tpu.dot_dimension_numbers<[1], [0], [0], [1], [0, 0, 1, 1], [], []>} : vector<2x32xf32>, vector<32x128xf32>, vector<2x128xf32> -> vector<2x128xf32>
    %267 = arith.addf %265, %266 : vector<2x128xf32>
    %268 = math.tanh %267 : vector<2x128xf32>
    %269 = vector.extract_strided_slice %268 {offsets = [0, 0], sizes = [2, 32], strides = [1, 1]} : vector<2x128xf32> to vector<2x32xf32>
    %cst_83 = arith.constant 5.000000e-01 : f32
    %270 = vector.broadcast %cst_83 : f32 to vector<2x32xf32>
    %271 = arith.mulf %269, %270 : vector<2x32xf32>
    %cst_84 = arith.constant 5.000000e-01 : f32
    %272 = vector.broadcast %cst_84 : f32 to vector<2x32xf32>
    %273 = arith.addf %271, %272 : vector<2x32xf32>
    %274 = vector.extract_strided_slice %268 {offsets = [0, 32], sizes = [2, 32], strides = [1, 1]} : vector<2x128xf32> to vector<2x32xf32>
    %cst_85 = arith.constant 5.000000e-01 : f32
    %275 = vector.broadcast %cst_85 : f32 to vector<2x32xf32>
    %276 = arith.mulf %274, %275 : vector<2x32xf32>
    %cst_86 = arith.constant 5.000000e-01 : f32
    %277 = vector.broadcast %cst_86 : f32 to vector<2x32xf32>
    %278 = arith.addf %276, %277 : vector<2x32xf32>
    %279 = vector.extract_strided_slice %268 {offsets = [0, 64], sizes = [2, 32], strides = [1, 1]} : vector<2x128xf32> to vector<2x32xf32>
    %280 = vector.extract_strided_slice %268 {offsets = [0, 96], sizes = [2, 32], strides = [1, 1]} : vector<2x128xf32> to vector<2x32xf32>
    %cst_87 = arith.constant 5.000000e-01 : f32
    %281 = vector.broadcast %cst_87 : f32 to vector<2x32xf32>
    %282 = arith.mulf %280, %281 : vector<2x32xf32>
    %cst_88 = arith.constant 5.000000e-01 : f32
    %283 = vector.broadcast %cst_88 : f32 to vector<2x32xf32>
    %284 = arith.addf %282, %283 : vector<2x32xf32>
    %285 = arith.mulf %278, %261 : vector<2x32xf32>
    %286 = arith.mulf %273, %279 : vector<2x32xf32>
    %287 = arith.addf %285, %286 : vector<2x32xf32>
    %288 = math.tanh %287 : vector<2x32xf32>
    %289 = arith.mulf %284, %288 : vector<2x32xf32>
    %290 = vector.extract_strided_slice %235 {offsets = [0, 2, 0], sizes = [2, 1, 128], strides = [1, 1, 1]} : vector<2x8x128xf32> to vector<2x1x128xf32>
    %291 = vector.shape_cast %290 : vector<2x1x128xf32> to vector<2x128xf32>
    %cst_89 = arith.constant dense<0.000000e+00> : vector<2x128xf32>
    %292 = tpu.matmul %289, %230, %cst_89 {dimension_numbers = #tpu.dot_dimension_numbers<[1], [0], [0], [1], [0, 0, 1, 1], [], []>} : vector<2x32xf32>, vector<32x128xf32>, vector<2x128xf32> -> vector<2x128xf32>
    %293 = arith.addf %291, %292 : vector<2x128xf32>
    %294 = math.tanh %293 : vector<2x128xf32>
    %295 = vector.extract_strided_slice %294 {offsets = [0, 0], sizes = [2, 32], strides = [1, 1]} : vector<2x128xf32> to vector<2x32xf32>
    %cst_90 = arith.constant 5.000000e-01 : f32
    %296 = vector.broadcast %cst_90 : f32 to vector<2x32xf32>
    %297 = arith.mulf %295, %296 : vector<2x32xf32>
    %cst_91 = arith.constant 5.000000e-01 : f32
    %298 = vector.broadcast %cst_91 : f32 to vector<2x32xf32>
    %299 = arith.addf %297, %298 : vector<2x32xf32>
    %300 = vector.extract_strided_slice %294 {offsets = [0, 32], sizes = [2, 32], strides = [1, 1]} : vector<2x128xf32> to vector<2x32xf32>
    %cst_92 = arith.constant 5.000000e-01 : f32
    %301 = vector.broadcast %cst_92 : f32 to vector<2x32xf32>
    %302 = arith.mulf %300, %301 : vector<2x32xf32>
    %cst_93 = arith.constant 5.000000e-01 : f32
    %303 = vector.broadcast %cst_93 : f32 to vector<2x32xf32>
    %304 = arith.addf %302, %303 : vector<2x32xf32>
    %305 = vector.extract_strided_slice %294 {offsets = [0, 64], sizes = [2, 32], strides = [1, 1]} : vector<2x128xf32> to vector<2x32xf32>
    %306 = vector.extract_strided_slice %294 {offsets = [0, 96], sizes = [2, 32], strides = [1, 1]} : vector<2x128xf32> to vector<2x32xf32>
    %cst_94 = arith.constant 5.000000e-01 : f32
    %307 = vector.broadcast %cst_94 : f32 to vector<2x32xf32>
    %308 = arith.mulf %306, %307 : vector<2x32xf32>
    %cst_95 = arith.constant 5.000000e-01 : f32
    %309 = vector.broadcast %cst_95 : f32 to vector<2x32xf32>
    %310 = arith.addf %308, %309 : vector<2x32xf32>
    %311 = arith.mulf %304, %287 : vector<2x32xf32>
    %312 = arith.mulf %299, %305 : vector<2x32xf32>
    %313 = arith.addf %311, %312 : vector<2x32xf32>
    %314 = math.tanh %313 : vector<2x32xf32>
    %315 = arith.mulf %310, %314 : vector<2x32xf32>
    %316 = vector.extract_strided_slice %235 {offsets = [0, 3, 0], sizes = [2, 1, 128], strides = [1, 1, 1]} : vector<2x8x128xf32> to vector<2x1x128xf32>
    %317 = vector.shape_cast %316 : vector<2x1x128xf32> to vector<2x128xf32>
    %cst_96 = arith.constant dense<0.000000e+00> : vector<2x128xf32>
    %318 = tpu.matmul %315, %230, %cst_96 {dimension_numbers = #tpu.dot_dimension_numbers<[1], [0], [0], [1], [0, 0, 1, 1], [], []>} : vector<2x32xf32>, vector<32x128xf32>, vector<2x128xf32> -> vector<2x128xf32>
    %319 = arith.addf %317, %318 : vector<2x128xf32>
    %320 = math.tanh %319 : vector<2x128xf32>
    %321 = vector.extract_strided_slice %320 {offsets = [0, 0], sizes = [2, 32], strides = [1, 1]} : vector<2x128xf32> to vector<2x32xf32>
    %cst_97 = arith.constant 5.000000e-01 : f32
    %322 = vector.broadcast %cst_97 : f32 to vector<2x32xf32>
    %323 = arith.mulf %321, %322 : vector<2x32xf32>
    %cst_98 = arith.constant 5.000000e-01 : f32
    %324 = vector.broadcast %cst_98 : f32 to vector<2x32xf32>
    %325 = arith.addf %323, %324 : vector<2x32xf32>
    %326 = vector.extract_strided_slice %320 {offsets = [0, 32], sizes = [2, 32], strides = [1, 1]} : vector<2x128xf32> to vector<2x32xf32>
    %cst_99 = arith.constant 5.000000e-01 : f32
    %327 = vector.broadcast %cst_99 : f32 to vector<2x32xf32>
    %328 = arith.mulf %326, %327 : vector<2x32xf32>
    %cst_100 = arith.constant 5.000000e-01 : f32
    %329 = vector.broadcast %cst_100 : f32 to vector<2x32xf32>
    %330 = arith.addf %328, %329 : vector<2x32xf32>
    %331 = vector.extract_strided_slice %320 {offsets = [0, 64], sizes = [2, 32], strides = [1, 1]} : vector<2x128xf32> to vector<2x32xf32>
    %332 = vector.extract_strided_slice %320 {offsets = [0, 96], sizes = [2, 32], strides = [1, 1]} : vector<2x128xf32> to vector<2x32xf32>
    %cst_101 = arith.constant 5.000000e-01 : f32
    %333 = vector.broadcast %cst_101 : f32 to vector<2x32xf32>
    %334 = arith.mulf %332, %333 : vector<2x32xf32>
    %cst_102 = arith.constant 5.000000e-01 : f32
    %335 = vector.broadcast %cst_102 : f32 to vector<2x32xf32>
    %336 = arith.addf %334, %335 : vector<2x32xf32>
    %337 = arith.mulf %330, %313 : vector<2x32xf32>
    %338 = arith.mulf %325, %331 : vector<2x32xf32>
    %339 = arith.addf %337, %338 : vector<2x32xf32>
    %340 = math.tanh %339 : vector<2x32xf32>
    %341 = arith.mulf %336, %340 : vector<2x32xf32>
    %342 = vector.extract_strided_slice %235 {offsets = [0, 4, 0], sizes = [2, 1, 128], strides = [1, 1, 1]} : vector<2x8x128xf32> to vector<2x1x128xf32>
    %343 = vector.shape_cast %342 : vector<2x1x128xf32> to vector<2x128xf32>
    %cst_103 = arith.constant dense<0.000000e+00> : vector<2x128xf32>
    %344 = tpu.matmul %341, %230, %cst_103 {dimension_numbers = #tpu.dot_dimension_numbers<[1], [0], [0], [1], [0, 0, 1, 1], [], []>} : vector<2x32xf32>, vector<32x128xf32>, vector<2x128xf32> -> vector<2x128xf32>
    %345 = arith.addf %343, %344 : vector<2x128xf32>
    %346 = math.tanh %345 : vector<2x128xf32>
    %347 = vector.extract_strided_slice %346 {offsets = [0, 0], sizes = [2, 32], strides = [1, 1]} : vector<2x128xf32> to vector<2x32xf32>
    %cst_104 = arith.constant 5.000000e-01 : f32
    %348 = vector.broadcast %cst_104 : f32 to vector<2x32xf32>
    %349 = arith.mulf %347, %348 : vector<2x32xf32>
    %cst_105 = arith.constant 5.000000e-01 : f32
    %350 = vector.broadcast %cst_105 : f32 to vector<2x32xf32>
    %351 = arith.addf %349, %350 : vector<2x32xf32>
    %352 = vector.extract_strided_slice %346 {offsets = [0, 32], sizes = [2, 32], strides = [1, 1]} : vector<2x128xf32> to vector<2x32xf32>
    %cst_106 = arith.constant 5.000000e-01 : f32
    %353 = vector.broadcast %cst_106 : f32 to vector<2x32xf32>
    %354 = arith.mulf %352, %353 : vector<2x32xf32>
    %cst_107 = arith.constant 5.000000e-01 : f32
    %355 = vector.broadcast %cst_107 : f32 to vector<2x32xf32>
    %356 = arith.addf %354, %355 : vector<2x32xf32>
    %357 = vector.extract_strided_slice %346 {offsets = [0, 64], sizes = [2, 32], strides = [1, 1]} : vector<2x128xf32> to vector<2x32xf32>
    %358 = vector.extract_strided_slice %346 {offsets = [0, 96], sizes = [2, 32], strides = [1, 1]} : vector<2x128xf32> to vector<2x32xf32>
    %cst_108 = arith.constant 5.000000e-01 : f32
    %359 = vector.broadcast %cst_108 : f32 to vector<2x32xf32>
    %360 = arith.mulf %358, %359 : vector<2x32xf32>
    %cst_109 = arith.constant 5.000000e-01 : f32
    %361 = vector.broadcast %cst_109 : f32 to vector<2x32xf32>
    %362 = arith.addf %360, %361 : vector<2x32xf32>
    %363 = arith.mulf %356, %339 : vector<2x32xf32>
    %364 = arith.mulf %351, %357 : vector<2x32xf32>
    %365 = arith.addf %363, %364 : vector<2x32xf32>
    %366 = math.tanh %365 : vector<2x32xf32>
    %367 = arith.mulf %362, %366 : vector<2x32xf32>
    %368 = vector.extract_strided_slice %235 {offsets = [0, 5, 0], sizes = [2, 1, 128], strides = [1, 1, 1]} : vector<2x8x128xf32> to vector<2x1x128xf32>
    %369 = vector.shape_cast %368 : vector<2x1x128xf32> to vector<2x128xf32>
    %cst_110 = arith.constant dense<0.000000e+00> : vector<2x128xf32>
    %370 = tpu.matmul %367, %230, %cst_110 {dimension_numbers = #tpu.dot_dimension_numbers<[1], [0], [0], [1], [0, 0, 1, 1], [], []>} : vector<2x32xf32>, vector<32x128xf32>, vector<2x128xf32> -> vector<2x128xf32>
    %371 = arith.addf %369, %370 : vector<2x128xf32>
    %372 = math.tanh %371 : vector<2x128xf32>
    %373 = vector.extract_strided_slice %372 {offsets = [0, 0], sizes = [2, 32], strides = [1, 1]} : vector<2x128xf32> to vector<2x32xf32>
    %cst_111 = arith.constant 5.000000e-01 : f32
    %374 = vector.broadcast %cst_111 : f32 to vector<2x32xf32>
    %375 = arith.mulf %373, %374 : vector<2x32xf32>
    %cst_112 = arith.constant 5.000000e-01 : f32
    %376 = vector.broadcast %cst_112 : f32 to vector<2x32xf32>
    %377 = arith.addf %375, %376 : vector<2x32xf32>
    %378 = vector.extract_strided_slice %372 {offsets = [0, 32], sizes = [2, 32], strides = [1, 1]} : vector<2x128xf32> to vector<2x32xf32>
    %cst_113 = arith.constant 5.000000e-01 : f32
    %379 = vector.broadcast %cst_113 : f32 to vector<2x32xf32>
    %380 = arith.mulf %378, %379 : vector<2x32xf32>
    %cst_114 = arith.constant 5.000000e-01 : f32
    %381 = vector.broadcast %cst_114 : f32 to vector<2x32xf32>
    %382 = arith.addf %380, %381 : vector<2x32xf32>
    %383 = vector.extract_strided_slice %372 {offsets = [0, 64], sizes = [2, 32], strides = [1, 1]} : vector<2x128xf32> to vector<2x32xf32>
    %384 = vector.extract_strided_slice %372 {offsets = [0, 96], sizes = [2, 32], strides = [1, 1]} : vector<2x128xf32> to vector<2x32xf32>
    %cst_115 = arith.constant 5.000000e-01 : f32
    %385 = vector.broadcast %cst_115 : f32 to vector<2x32xf32>
    %386 = arith.mulf %384, %385 : vector<2x32xf32>
    %cst_116 = arith.constant 5.000000e-01 : f32
    %387 = vector.broadcast %cst_116 : f32 to vector<2x32xf32>
    %388 = arith.addf %386, %387 : vector<2x32xf32>
    %389 = arith.mulf %382, %365 : vector<2x32xf32>
    %390 = arith.mulf %377, %383 : vector<2x32xf32>
    %391 = arith.addf %389, %390 : vector<2x32xf32>
    %392 = math.tanh %391 : vector<2x32xf32>
    %393 = arith.mulf %388, %392 : vector<2x32xf32>
    %394 = vector.extract_strided_slice %235 {offsets = [0, 6, 0], sizes = [2, 1, 128], strides = [1, 1, 1]} : vector<2x8x128xf32> to vector<2x1x128xf32>
    %395 = vector.shape_cast %394 : vector<2x1x128xf32> to vector<2x128xf32>
    %cst_117 = arith.constant dense<0.000000e+00> : vector<2x128xf32>
    %396 = tpu.matmul %393, %230, %cst_117 {dimension_numbers = #tpu.dot_dimension_numbers<[1], [0], [0], [1], [0, 0, 1, 1], [], []>} : vector<2x32xf32>, vector<32x128xf32>, vector<2x128xf32> -> vector<2x128xf32>
    %397 = arith.addf %395, %396 : vector<2x128xf32>
    %398 = math.tanh %397 : vector<2x128xf32>
    %399 = vector.extract_strided_slice %398 {offsets = [0, 0], sizes = [2, 32], strides = [1, 1]} : vector<2x128xf32> to vector<2x32xf32>
    %cst_118 = arith.constant 5.000000e-01 : f32
    %400 = vector.broadcast %cst_118 : f32 to vector<2x32xf32>
    %401 = arith.mulf %399, %400 : vector<2x32xf32>
    %cst_119 = arith.constant 5.000000e-01 : f32
    %402 = vector.broadcast %cst_119 : f32 to vector<2x32xf32>
    %403 = arith.addf %401, %402 : vector<2x32xf32>
    %404 = vector.extract_strided_slice %398 {offsets = [0, 32], sizes = [2, 32], strides = [1, 1]} : vector<2x128xf32> to vector<2x32xf32>
    %cst_120 = arith.constant 5.000000e-01 : f32
    %405 = vector.broadcast %cst_120 : f32 to vector<2x32xf32>
    %406 = arith.mulf %404, %405 : vector<2x32xf32>
    %cst_121 = arith.constant 5.000000e-01 : f32
    %407 = vector.broadcast %cst_121 : f32 to vector<2x32xf32>
    %408 = arith.addf %406, %407 : vector<2x32xf32>
    %409 = vector.extract_strided_slice %398 {offsets = [0, 64], sizes = [2, 32], strides = [1, 1]} : vector<2x128xf32> to vector<2x32xf32>
    %410 = vector.extract_strided_slice %398 {offsets = [0, 96], sizes = [2, 32], strides = [1, 1]} : vector<2x128xf32> to vector<2x32xf32>
    %cst_122 = arith.constant 5.000000e-01 : f32
    %411 = vector.broadcast %cst_122 : f32 to vector<2x32xf32>
    %412 = arith.mulf %410, %411 : vector<2x32xf32>
    %cst_123 = arith.constant 5.000000e-01 : f32
    %413 = vector.broadcast %cst_123 : f32 to vector<2x32xf32>
    %414 = arith.addf %412, %413 : vector<2x32xf32>
    %415 = arith.mulf %408, %391 : vector<2x32xf32>
    %416 = arith.mulf %403, %409 : vector<2x32xf32>
    %417 = arith.addf %415, %416 : vector<2x32xf32>
    %418 = math.tanh %417 : vector<2x32xf32>
    %419 = arith.mulf %414, %418 : vector<2x32xf32>
    %420 = vector.extract_strided_slice %235 {offsets = [0, 7, 0], sizes = [2, 1, 128], strides = [1, 1, 1]} : vector<2x8x128xf32> to vector<2x1x128xf32>
    %421 = vector.shape_cast %420 : vector<2x1x128xf32> to vector<2x128xf32>
    %cst_124 = arith.constant dense<0.000000e+00> : vector<2x128xf32>
    %422 = tpu.matmul %419, %230, %cst_124 {dimension_numbers = #tpu.dot_dimension_numbers<[1], [0], [0], [1], [0, 0, 1, 1], [], []>} : vector<2x32xf32>, vector<32x128xf32>, vector<2x128xf32> -> vector<2x128xf32>
    %423 = arith.addf %421, %422 : vector<2x128xf32>
    %424 = math.tanh %423 : vector<2x128xf32>
    %425 = vector.extract_strided_slice %424 {offsets = [0, 0], sizes = [2, 32], strides = [1, 1]} : vector<2x128xf32> to vector<2x32xf32>
    %cst_125 = arith.constant 5.000000e-01 : f32
    %426 = vector.broadcast %cst_125 : f32 to vector<2x32xf32>
    %427 = arith.mulf %425, %426 : vector<2x32xf32>
    %cst_126 = arith.constant 5.000000e-01 : f32
    %428 = vector.broadcast %cst_126 : f32 to vector<2x32xf32>
    %429 = arith.addf %427, %428 : vector<2x32xf32>
    %430 = vector.extract_strided_slice %424 {offsets = [0, 32], sizes = [2, 32], strides = [1, 1]} : vector<2x128xf32> to vector<2x32xf32>
    %cst_127 = arith.constant 5.000000e-01 : f32
    %431 = vector.broadcast %cst_127 : f32 to vector<2x32xf32>
    %432 = arith.mulf %430, %431 : vector<2x32xf32>
    %cst_128 = arith.constant 5.000000e-01 : f32
    %433 = vector.broadcast %cst_128 : f32 to vector<2x32xf32>
    %434 = arith.addf %432, %433 : vector<2x32xf32>
    %435 = vector.extract_strided_slice %424 {offsets = [0, 64], sizes = [2, 32], strides = [1, 1]} : vector<2x128xf32> to vector<2x32xf32>
    %436 = vector.extract_strided_slice %424 {offsets = [0, 96], sizes = [2, 32], strides = [1, 1]} : vector<2x128xf32> to vector<2x32xf32>
    %cst_129 = arith.constant 5.000000e-01 : f32
    %437 = vector.broadcast %cst_129 : f32 to vector<2x32xf32>
    %438 = arith.mulf %436, %437 : vector<2x32xf32>
    %cst_130 = arith.constant 5.000000e-01 : f32
    %439 = vector.broadcast %cst_130 : f32 to vector<2x32xf32>
    %440 = arith.addf %438, %439 : vector<2x32xf32>
    %441 = arith.mulf %434, %417 : vector<2x32xf32>
    %442 = arith.mulf %429, %435 : vector<2x32xf32>
    %443 = arith.addf %441, %442 : vector<2x32xf32>
    %444 = math.tanh %443 : vector<2x32xf32>
    %445 = arith.mulf %440, %444 : vector<2x32xf32>
    %446 = vector.shape_cast %263 : vector<2x32xf32> to vector<2x1x32xf32>
    %447 = vector.shape_cast %289 : vector<2x32xf32> to vector<2x1x32xf32>
    %448 = vector.shape_cast %315 : vector<2x32xf32> to vector<2x1x32xf32>
    %449 = vector.shape_cast %341 : vector<2x32xf32> to vector<2x1x32xf32>
    %450 = vector.shape_cast %367 : vector<2x32xf32> to vector<2x1x32xf32>
    %451 = vector.shape_cast %393 : vector<2x32xf32> to vector<2x1x32xf32>
    %452 = vector.shape_cast %419 : vector<2x32xf32> to vector<2x1x32xf32>
    %453 = vector.shape_cast %445 : vector<2x32xf32> to vector<2x1x32xf32>
    %454 = tpu.concatenate %446, %447, %448, %449, %450, %451, %452, %453 in 1 : vector<2x1x32xf32>, vector<2x1x32xf32>, vector<2x1x32xf32>, vector<2x1x32xf32>, vector<2x1x32xf32>, vector<2x1x32xf32>, vector<2x1x32xf32>, vector<2x1x32xf32> -> vector<2x8x32xf32>
    %455 = vector.shape_cast %454 : vector<2x8x32xf32> to vector<16x32xf32>
    %c0_131 = arith.constant 0 : index
    %c0_132 = arith.constant 0 : index
    %456 = vector.load %arg7[%c0_131, %c0_132] : memref<32x4xf32, #tpu.memory_space<vmem>>, vector<32x4xf32>
    %cst_133 = arith.constant dense<0.000000e+00> : vector<16x4xf32>
    %457 = tpu.matmul %455, %456, %cst_133 {dimension_numbers = #tpu.dot_dimension_numbers<[1], [0], [0], [1], [0, 0, 1, 1], [], []>} : vector<16x32xf32>, vector<32x4xf32>, vector<16x4xf32> -> vector<16x4xf32>
    %c0_134 = arith.constant 0 : index
    %c0_135 = arith.constant 0 : index
    %458 = vector.load %arg8[%c0_134, %c0_135] : memref<1x4xf32, #tpu.memory_space<vmem>>, vector<1x4xf32>
    %459 = vector.broadcast %458 : vector<1x4xf32> to vector<16x4xf32>
    %460 = arith.addf %457, %459 : vector<16x4xf32>
    %461 = vector.shape_cast %460 : vector<16x4xf32> to vector<2x8x4xf32>
    %c0_136 = arith.constant 0 : index
    %c0_137 = arith.constant 0 : index
    %c0_138 = arith.constant 0 : index
    %462 = vector.load %arg9[%c0_136, %c0_137, %c0_138] : memref<2x8x4xf32, #tpu.memory_space<vmem>>, vector<2x8x4xf32>
    tpu.vector_store %arg9[%c0_136, %c0_137, %c0_138], %461 {strides = array<i32>} : memref<2x8x4xf32, #tpu.memory_space<vmem>>, vector<2x8x4xf32>,
    return
  }
}

</mosaic_0001>

<llo_original>
// kernel: lstm_model.1
$region0: #{lstm_model.1}
  #allocation0 [shape = 'u32[]', space=smem, size = 0x4, offset = 0x4, fixed_abs, tag = 'smem constant byte address 0x4 - core index']
  #allocation1 [shape = 'u32[144,128]{1,0:T(1,128)}', space=vmem, size = 0x12000, scoped, tag = 'internal scratch']
  %s0 = inlined_call_operand.vmem [shape: f32[2,8,4], index: 0, kind: input, shape index: {}]
  %s1 = inlined_call_operand.vmem [shape: f32[4,128], index: 1, kind: input, shape index: {}]
  %s2 = inlined_call_operand.hbm [shape: f32[32,128], index: 2, kind: input, shape index: {}]
  %s3 = inlined_call_operand.hbm [shape: f32[1,128], index: 3, kind: input, shape index: {}]
  %s4 = inlined_call_operand.hbm [shape: f32[32,128], index: 4, kind: input, shape index: {}]
  %s5 = inlined_call_operand.hbm [shape: f32[32,128], index: 5, kind: input, shape index: {}]
  %s6 = inlined_call_operand.hbm [shape: f32[1,128], index: 6, kind: input, shape index: {}]
  %s7 = inlined_call_operand.vmem [shape: f32[32,4], index: 7, kind: input, shape index: {}]
  %s8 = inlined_call_operand.vmem [shape: f32[1,4], index: 8, kind: input, shape index: {}]
  %s9 = inlined_call_operand.vmem [shape: f32[2,8,4], index: 9, kind: output, shape index: {}]
  %s10 = sld [smem:[#allocation0]]
  $region66: #{lstm_model.1} parent=0
    _
  %s12 = ssub.s32 1, %s10
  %s13 = scalar_select 0, %s12, %s10
  $region1: #{lstm_model.1} parent=0
    #allocation2 [shape = 'u8[16384]{0}', space=vmem, size = 0x4000, scoped, tag = 'input window, operand 2, single buffered']
    #allocation3 [shape = 's32[1]{0}', space=sflag, size = 0x4, scoped, tag = 'scoped memory for lstm_model.1']
    #allocation4 [shape = 'u8[512]{0}', space=vmem, size = 0x400, scoped, tag = 'input window, operand 3, single buffered']
    #allocation5 [shape = 's32[1]{0}', space=sflag, size = 0x4, scoped, tag = 'scoped memory for lstm_model.1']
    #allocation6 [shape = 'u8[16384]{0}', space=vmem, size = 0x4000, scoped, tag = 'input window, operand 4, single buffered']
    #allocation7 [shape = 'u8[16384]{0}', space=vmem, size = 0x4000, scoped, tag = 'input window, operand 5, single buffered']
    #allocation8 [shape = 's32[1]{0}', space=sflag, size = 0x4, scoped, tag = 'scoped memory for lstm_model.1']
    #allocation9 [shape = 'u8[512]{0}', space=vmem, size = 0x400, scoped, tag = 'input window, operand 6, single buffered']
    %14 = vsyncpa [#allocation3], 0
    %15 = vsyncpa [#allocation5], 0
    %16 = vsyncpa [#allocation8], 0
    // Predicated region
    $region2: #{lstm_model.1} parent=1 // pred_check
      _
    $region3: #{lstm_model.1} parent=1 // pred_check_branch
      %18 = sbr.rel (0) target = $region5
    $region4: #{lstm_model.1} parent=1 // pred_region
      _
    $region5: #{lstm_model.1} parent=1 // pred_fallthru
      _
    // Predicated region
    $region6: #{lstm_model.1} parent=1 // pred_check
      _
    $region7: #{lstm_model.1} parent=1 // pred_check_branch
      %20 = sbr.rel (0) target = $region9
    $region8: #{lstm_model.1} parent=1 // pred_region
      _
    $region9: #{lstm_model.1} parent=1 // pred_fallthru
      _
    // Predicated region
    $region10: #{lstm_model.1} parent=1 // pred_check
      _
    $region11: #{lstm_model.1} parent=1 // pred_check_branch
      %22 = sbr.rel (0) target = $region13
    $region12: #{lstm_model.1} parent=1 // pred_region
      %s24 = ssub.s32 512, 512
      %25 = vsyncadd [#allocation3], %s24
      %s26 = sshll.u32 [#allocation2], 4
      %s27 = int_to_ptr.vmem [resolvable:$true] %s26
      %32 = dma.hbm_to_vmem [thread:$0]  %s2, 512, %s27, [#allocation3], 128, 128, 8
    $region13: #{lstm_model.1} parent=1 // pred_fallthru
      _
    // Predicated region
    $region14: #{lstm_model.1} parent=1 // pred_check
      _
    $region15: #{lstm_model.1} parent=1 // pred_check_branch
      %34 = sbr.rel (0) target = $region17
    $region16: #{lstm_model.1} parent=1 // pred_region
      %s36 = ssub.s32 16, 16
      %37 = vsyncadd [#allocation5], %s36
      %s39 = sshll.u32 [#allocation4], 4
      %s40 = int_to_ptr.vmem [resolvable:$true] %s39
      %42 = dma.hbm_to_vmem [thread:$0]  %s3, 16, %s40, [#allocation5]
    $region17: #{lstm_model.1} parent=1 // pred_fallthru
      _
    // Predicated region
    $region18: #{lstm_model.1} parent=1 // pred_check
      _
    $region19: #{lstm_model.1} parent=1 // pred_check_branch
      %44 = sbr.rel (0) target = $region21
    $region20: #{lstm_model.1} parent=1 // pred_region
      %s46 = ssub.s32 512, 512
      %47 = vsyncadd [#allocation5], %s46
      %s48 = sshll.u32 [#allocation6], 4
      %s49 = int_to_ptr.vmem [resolvable:$true] %s48
      %54 = dma.hbm_to_vmem [thread:$0]  %s4, 512, %s49, [#allocation5], 128, 128, 8
    $region21: #{lstm_model.1} parent=1 // pred_fallthru
      _
    // Predicated region
    $region22: #{lstm_model.1} parent=1 // pred_check
      _
    $region23: #{lstm_model.1} parent=1 // pred_check_branch
      %56 = sbr.rel (0) target = $region25
    $region24: #{lstm_model.1} parent=1 // pred_region
      %s58 = ssub.s32 512, 512
      %59 = vsyncadd [#allocation8], %s58
      %s60 = sshll.u32 [#allocation7], 4
      %s61 = int_to_ptr.vmem [resolvable:$true] %s60
      %66 = dma.hbm_to_vmem [thread:$0]  %s5, 512, %s61, [#allocation8], 128, 128, 8
    $region25: #{lstm_model.1} parent=1 // pred_fallthru
      _
    // Predicated region
    $region26: #{lstm_model.1} parent=1 // pred_check
      _
    $region27: #{lstm_model.1} parent=1 // pred_check_branch
      %68 = sbr.rel (0) target = $region29
    $region28: #{lstm_model.1} parent=1 // pred_region
      %s70 = ssub.s32 16, 16
      %71 = vsyncadd [#allocation8], %s70
      %s73 = sshll.u32 [#allocation9], 4
      %s74 = int_to_ptr.vmem [resolvable:$true] %s73
      %76 = dma.hbm_to_vmem [thread:$0]  %s6, 16, %s74, [#allocation8]
    $region29: #{lstm_model.1} parent=1 // pred_fallthru
      _
    // Predicated region
    $region30: #{lstm_model.1} parent=1 // pred_check
      _
    $region31: #{lstm_model.1} parent=1 // pred_check_branch
      %78 = sbr.rel (0) target = $region33
    $region32: #{lstm_model.1} parent=1 // pred_region
      _
    $region33: #{lstm_model.1} parent=1 // pred_fallthru
      _
    // Predicated region
    $region34: #{lstm_model.1} parent=1 // pred_check
      _
    $region35: #{lstm_model.1} parent=1 // pred_check_branch
      %80 = sbr.rel (0) target = $region37
    $region36: #{lstm_model.1} parent=1 // pred_region
      _
    $region37: #{lstm_model.1} parent=1 // pred_fallthru
      _
    // Predicated region
    $region38: #{lstm_model.1} parent=1 // pred_check
      _
    $region39: #{lstm_model.1} parent=1 // pred_check_branch
      %82 = sbr.rel (0) target = $region41
    $region40: #{lstm_model.1} parent=1 // pred_region
      %83 = dma.done [#allocation3], 512
    $region41: #{lstm_model.1} parent=1 // pred_fallthru
      _
    // Predicated region
    $region42: #{lstm_model.1} parent=1 // pred_check
      _
    $region43: #{lstm_model.1} parent=1 // pred_check_branch
      %85 = sbr.rel (0) target = $region45
    $region44: #{lstm_model.1} parent=1 // pred_region
      %86 = dma.done [#allocation5], 16
    $region45: #{lstm_model.1} parent=1 // pred_fallthru
      _
    // Predicated region
    $region46: #{lstm_model.1} parent=1 // pred_check
      _
    $region47: #{lstm_model.1} parent=1 // pred_check_branch
      %88 = sbr.rel (0) target = $region49
    $region48: #{lstm_model.1} parent=1 // pred_region
      %89 = dma.done [#allocation5], 512
    $region49: #{lstm_model.1} parent=1 // pred_fallthru
      _
    // Predicated region
    $region50: #{lstm_model.1} parent=1 // pred_check
      _
    $region51: #{lstm_model.1} parent=1 // pred_check_branch
      %91 = sbr.rel (0) target = $region53
    $region52: #{lstm_model.1} parent=1 // pred_region
      %92 = dma.done [#allocation8], 512
    $region53: #{lstm_model.1} parent=1 // pred_fallthru
      _
    // Predicated region
    $region54: #{lstm_model.1} parent=1 // pred_check
      _
    $region55: #{lstm_model.1} parent=1 // pred_check_branch
      %94 = sbr.rel (0) target = $region57
    $region56: #{lstm_model.1} parent=1 // pred_region
      %95 = dma.done [#allocation8], 16
    $region57: #{lstm_model.1} parent=1 // pred_fallthru
      _
    %v96 = vld [vmem:[%s0] sm:$0xff]
    %v97 = vld [vmem:[%s0 + $0x8] sm:$0xff]
    %v98 = vld [vmem:[%s1] sm:$0xf]
    %v99 = vld [vmem:[#allocation2] sm:$0xff]
    %v100 = vld [vmem:[#allocation2 + $0x8] sm:$0xff]
    %v101 = vld [vmem:[#allocation2 + $0x10] sm:$0xff]
    %v102 = vld [vmem:[#allocation2 + $0x18] sm:$0xff]
    %v103 = vld [vmem:[#allocation4] sm:$0x1]
    %v105 = vlaneseq
    %v106 = vshrl.u32 %v105, 7
    %v107 = vsub.s32 0, %v106
    %v108 = vrot.slane %v103, %v107
    %vm110 = vcmask 31744
    %v112 = vsel %vm110, %v96, 0
    %v115 = vsel %vm110, %v97, 0
    %vm117 = vcmask 1043456
    %v119 = vsel %vm117, %v98, 0
    %121 = vmatprep.subr.mxu0 0.0
    %122 = vmatpush1.msra.mxu0 0.0
    %123 = vmatprep.subr.mxu0 0.0
    %124 = vmatpush1.msra.mxu0 0.0
    %125 = vmatprep.subr.mxu0 0.0
    %126 = vmatpush1.msra.mxu0 0.0
    %127 = vmatprep.subr.mxu0 0.0
    %128 = vmatpush1.msra.mxu0 0.0
    %129 = vmatprep.subr.mxu0 0.0
    %130 = vmatpush1.msra.mxu0 0.0
    %131 = vmatprep.subr.mxu0 0.0
    %132 = vmatpush1.msra.mxu0 0.0
    %133 = vmatprep.subr.mxu0 0.0
    %134 = vmatpush1.msra.mxu0 0.0
    %135 = vmatprep.subr.mxu0 0.0
    %136 = vmatpush1.msra.mxu0 0.0
    %137 = vmatprep.subr.mxu0 0.0
    %138 = vmatpush1.msra.mxu0 0.0
    %139 = vmatprep.subr.mxu0 0.0
    %140 = vmatpush1.msra.mxu0 0.0
    %141 = vmatprep.subr.mxu0 0.0
    %142 = vmatpush1.msra.mxu0 0.0
    %143 = vmatprep.subr.mxu0 0.0
    %144 = vmatpush1.msra.mxu0 0.0
    %145 = vmatprep.subr.mxu0 0.0
    %146 = vmatpush1.msra.mxu0 0.0
    %147 = vmatprep.subr.mxu0 0.0
    %148 = vmatpush1.msra.mxu0 0.0
    %149 = vmatprep.subr.mxu0 0.0
    %150 = vmatpush1.msra.mxu0 0.0
    %151 = vmatprep.subr.mxu0 0.0
    %152 = vmatpush1.msra.mxu0 %v119
    %153 = vmatprep.subr.mxu0 0.0
    %154 = vmatpush2.msra.mxu0 0.0
    %155 = vmatprep.subr.mxu0 0.0
    %156 = vmatpush2.msra.mxu0 0.0
    %157 = vmatprep.subr.mxu0 0.0
    %158 = vmatpush2.msra.mxu0 0.0
    %159 = vmatprep.subr.mxu0 0.0
    %160 = vmatpush2.msra.mxu0 0.0
    %161 = vmatprep.subr.mxu0 0.0
    %162 = vmatpush2.msra.mxu0 0.0
    %163 = vmatprep.subr.mxu0 0.0
    %164 = vmatpush2.msra.mxu0 0.0
    %165 = vmatprep.subr.mxu0 0.0
    %166 = vmatpush2.msra.mxu0 0.0
    %167 = vmatprep.subr.mxu0 0.0
    %168 = vmatpush2.msra.mxu0 0.0
    %169 = vmatprep.subr.mxu0 0.0
    %170 = vmatpush2.msra.mxu0 0.0
    %171 = vmatprep.subr.mxu0 0.0
    %172 = vmatpush2.msra.mxu0 0.0
    %173 = vmatprep.subr.mxu0 0.0
    %174 = vmatpush2.msra.mxu0 0.0
    %175 = vmatprep.subr.mxu0 0.0
    %176 = vmatpush2.msra.mxu0 0.0
    %177 = vmatprep.subr.mxu0 0.0
    %178 = vmatpush2.msra.mxu0 0.0
    %179 = vmatprep.subr.mxu0 0.0
    %180 = vmatpush2.msra.mxu0 0.0
    %181 = vmatprep.subr.mxu0 0.0
    %182 = vmatpush2.msra.mxu0 0.0
    %183 = vmatprep.subr.mxu0 0.0
    %184 = vmatpush2.msra.mxu0 0.0
    %185 = vmatprep.mubr.f32.mxu0 0.0
    %186 = vmatmul.mubr.f32.gmra.mxu0 %v112
    %v187 = vpop.f32.mrf.mxu0
    %v188 = vadd.f32 %v108, %v187
    %v189 = vpop.f32.mrf.mxu0
    %190 = vmatprep.mubr.f32.mxu0 0.0
    %191 = vmatmul.mubr.f32.gmra.mxu0 %v115
    %v192 = vpop.f32.mrf.mxu0
    %v193 = vadd.f32 %v108, %v192
    %v194 = vpop.f32.mrf.mxu0
    %195 = vdwg.mxu0
    %vm196 = vcmask 261120
    %v198 = vsel %vm196, 0.0, 0
    %200 = vmatprep.subr.mxu0 0.0
    %201 = vmatpush1.msra.mxu0 0.0
    %202 = vmatprep.subr.mxu0 0.0
    %203 = vmatpush1.msra.mxu0 0.0
    %204 = vmatprep.subr.mxu0 0.0
    %205 = vmatpush1.msra.mxu0 0.0
    %206 = vmatprep.subr.mxu0 0.0
    %207 = vmatpush1.msra.mxu0 0.0
    %208 = vmatprep.subr.mxu0 0.0
    %209 = vmatpush1.msra.mxu0 0.0
    %210 = vmatprep.subr.mxu0 0.0
    %211 = vmatpush1.msra.mxu0 0.0
    %212 = vmatprep.subr.mxu0 0.0
    %213 = vmatpush1.msra.mxu0 0.0
    %214 = vmatprep.subr.mxu0 0.0
    %215 = vmatpush1.msra.mxu0 0.0
    %216 = vmatprep.subr.mxu0 0.0
    %217 = vmatpush1.msra.mxu0 0.0
    %218 = vmatprep.subr.mxu0 0.0
    %219 = vmatpush1.msra.mxu0 0.0
    %220 = vmatprep.subr.mxu0 0.0
    %221 = vmatpush1.msra.mxu0 0.0
    %222 = vmatprep.subr.mxu0 0.0
    %223 = vmatpush1.msra.mxu0 0.0
    %224 = vmatprep.subr.mxu0 0.0
    %225 = vmatpush1.msra.mxu0 %v102
    %226 = vmatprep.subr.mxu0 0.0
    %227 = vmatpush1.msra.mxu0 %v101
    %228 = vmatprep.subr.mxu0 0.0
    %229 = vmatpush1.msra.mxu0 %v100
    %230 = vmatprep.subr.mxu0 0.0
    %231 = vmatpush1.msra.mxu0 %v99
    %232 = vmatprep.subr.mxu0 0.0
    %233 = vmatpush2.msra.mxu0 0.0
    %234 = vmatprep.subr.mxu0 0.0
    %235 = vmatpush2.msra.mxu0 0.0
    %236 = vmatprep.subr.mxu0 0.0
    %237 = vmatpush2.msra.mxu0 0.0
    %238 = vmatprep.subr.mxu0 0.0
    %239 = vmatpush2.msra.mxu0 0.0
    %240 = vmatprep.subr.mxu0 0.0
    %241 = vmatpush2.msra.mxu0 0.0
    %242 = vmatprep.subr.mxu0 0.0
    %243 = vmatpush2.msra.mxu0 0.0
    %244 = vmatprep.subr.mxu0 0.0
    %245 = vmatpush2.msra.mxu0 0.0
    %246 = vmatprep.subr.mxu0 0.0
    %247 = vmatpush2.msra.mxu0 0.0
    %248 = vmatprep.subr.mxu0 0.0
    %249 = vmatpush2.msra.mxu0 0.0
    %250 = vmatprep.subr.mxu0 0.0
    %251 = vmatpush2.msra.mxu0 0.0
    %252 = vmatprep.subr.mxu0 0.0
    %253 = vmatpush2.msra.mxu0 0.0
    %254 = vmatprep.subr.mxu0 0.0
    %255 = vmatpush2.msra.mxu0 0.0
    %256 = vmatprep.subr.mxu0 0.0
    %257 = vmatpush2.msra.mxu0 0.0
    %258 = vmatprep.subr.mxu0 0.0
    %259 = vmatpush2.msra.mxu0 0.0
    %260 = vmatprep.subr.mxu0 0.0
    %261 = vmatpush2.msra.mxu0 0.0
    %262 = vmatprep.subr.mxu0 0.0
    %263 = vmatpush2.msra.mxu0 0.0
    %264 = vmatprep.mubr.f32.mxu0 0.0
    %265 = vmatmul.mubr.f32.gmra.mxu0 %v198
    %v266 = vpop.f32.mrf.mxu0
    %v267 = vadd.f32 0.0, %v266
    %v268 = vpop.f32.mrf.mxu0
    %269 = vdwg.mxu0
    %v271 = vrot.slane %v267, 1
    %v274 = vadd.f32 %v188, %v267
    %v275 = vadd.f32 %v193, %v271
    %v276 = vtanh.pop %v274
    %v277 = vtanh.pop %v275
    %v278 = vmul.f32 %v276, 0.5
    %v279 = vmul.f32 %v277, 0.5
    %v280 = vadd.f32 %v278, 0.5
    %v281 = vadd.f32 %v279, 0.5
    %v282 = vmul.f32 %v280, 0.0
    %v283 = vmul.f32 %v281, 0.0
    %286 = vrot.lane.b32.xlu0 %v276, 64
    %v287 = vpop.permute.xlu0 %286
    %288 = vrot.lane.b32.xlu0 %v277, 64
    %v289 = vpop.permute.xlu0 %288
    %v292 = vmul.f32 %v280, %v287
    %v293 = vmul.f32 %v281, %v289
    %296 = vrot.lane.b32.xlu0 %v292, 32
    %v297 = vpop.permute.xlu0 %296
    %298 = vrot.lane.b32.xlu0 %v293, 32
    %v299 = vpop.permute.xlu0 %298
    %v302 = vadd.f32 %v282, %v297
    %v303 = vadd.f32 %v283, %v299
    %v304 = vtanh.pop %v302
    %v305 = vtanh.pop %v303
    %308 = vrot.lane.b32.xlu0 %v304, 64
    %v309 = vpop.permute.xlu0 %308
    %310 = vrot.lane.b32.xlu0 %v305, 64
    %v311 = vpop.permute.xlu0 %310
    %v314 = vmul.f32 %v280, %v309
    %v315 = vmul.f32 %v281, %v311
    %v318 = vrot.slane %v315, 7
    %vm319 = vcmask 1041409
    %v320 = vsel %vm319, %v318, %v314
    %321 = vrot.lane.b32.xlu0 %v320, 32
    %v322 = vpop.permute.xlu0 %321
    %v323 = vsel %vm196, %v322, 0
    %325 = vmatprep.subr.mxu0 0.0
    %326 = vmatpush1.msra.mxu0 0.0
    %327 = vmatprep.subr.mxu0 0.0
    %328 = vmatpush1.msra.mxu0 0.0
    %329 = vmatprep.subr.mxu0 0.0
    %330 = vmatpush1.msra.mxu0 0.0
    %331 = vmatprep.subr.mxu0 0.0
    %332 = vmatpush1.msra.mxu0 0.0
    %333 = vmatprep.subr.mxu0 0.0
    %334 = vmatpush1.msra.mxu0 0.0
    %335 = vmatprep.subr.mxu0 0.0
    %336 = vmatpush1.msra.mxu0 0.0
    %337 = vmatprep.subr.mxu0 0.0
    %338 = vmatpush1.msra.mxu0 0.0
    %339 = vmatprep.subr.mxu0 0.0
    %340 = vmatpush1.msra.mxu0 0.0
    %341 = vmatprep.subr.mxu0 0.0
    %342 = vmatpush1.msra.mxu0 0.0
    %343 = vmatprep.subr.mxu0 0.0
    %344 = vmatpush1.msra.mxu0 0.0
    %345 = vmatprep.subr.mxu0 0.0
    %346 = vmatpush1.msra.mxu0 0.0
    %347 = vmatprep.subr.mxu0 0.0
    %348 = vmatpush1.msra.mxu0 0.0
    %349 = vmatprep.subr.mxu0 0.0
    %350 = vmatpush1.msra.mxu0 %v102
    %351 = vmatprep.subr.mxu0 0.0
    %352 = vmatpush1.msra.mxu0 %v101
    %353 = vmatprep.subr.mxu0 0.0
    %354 = vmatpush1.msra.mxu0 %v100
    %355 = vmatprep.subr.mxu0 0.0
    %356 = vmatpush1.msra.mxu0 %v99
    %357 = vmatprep.subr.mxu0 0.0
    %358 = vmatpush2.msra.mxu0 0.0
    %359 = vmatprep.subr.mxu0 0.0
    %360 = vmatpush2.msra.mxu0 0.0
    %361 = vmatprep.subr.mxu0 0.0
    %362 = vmatpush2.msra.mxu0 0.0
    %363 = vmatprep.subr.mxu0 0.0
    %364 = vmatpush2.msra.mxu0 0.0
    %365 = vmatprep.subr.mxu0 0.0
    %366 = vmatpush2.msra.mxu0 0.0
    %367 = vmatprep.subr.mxu0 0.0
    %368 = vmatpush2.msra.mxu0 0.0
    %369 = vmatprep.subr.mxu0 0.0
    %370 = vmatpush2.msra.mxu0 0.0
    %371 = vmatprep.subr.mxu0 0.0
    %372 = vmatpush2.msra.mxu0 0.0
    %373 = vmatprep.subr.mxu0 0.0
    %374 = vmatpush2.msra.mxu0 0.0
    %375 = vmatprep.subr.mxu0 0.0
    %376 = vmatpush2.msra.mxu0 0.0
    %377 = vmatprep.subr.mxu0 0.0
    %378 = vmatpush2.msra.mxu0 0.0
    %379 = vmatprep.subr.mxu0 0.0
    %380 = vmatpush2.msra.mxu0 0.0
    %381 = vmatprep.subr.mxu0 0.0
    %382 = vmatpush2.msra.mxu0 0.0
    %383 = vmatprep.subr.mxu0 0.0
    %384 = vmatpush2.msra.mxu0 0.0
    %385 = vmatprep.subr.mxu0 0.0
    %386 = vmatpush2.msra.mxu0 0.0
    %387 = vmatprep.subr.mxu0 0.0
    %388 = vmatpush2.msra.mxu0 0.0
    %389 = vmatprep.mubr.f32.mxu0 0.0
    %390 = vmatmul.mubr.f32.gmra.mxu0 %v323
    %v391 = vpop.f32.mrf.mxu0
    %v392 = vadd.f32 0.0, %v391
    %v393 = vpop.f32.mrf.mxu0
    %394 = vdwg.mxu0
    %v396 = vrot.slane %v392, 7
    %v399 = vadd.f32 %v188, %v396
    %v400 = vadd.f32 %v193, %v392
    %v401 = vtanh.pop %v399
    %v402 = vtanh.pop %v400
    %v403 = vmul.f32 %v401, 0.5
    %v404 = vmul.f32 %v402, 0.5
    %v405 = vadd.f32 %v403, 0.5
    %v406 = vadd.f32 %v404, 0.5
    %v409 = vrot.slane %v302, 7
    %v410 = vrot.slane %v303, 7
    %v413 = vmul.f32 %v405, %v409
    %v414 = vmul.f32 %v406, %v410
    %417 = vrot.lane.b32.xlu0 %v401, 64
    %v418 = vpop.permute.xlu0 %417
    %419 = vrot.lane.b32.xlu0 %v402, 64
    %v420 = vpop.permute.xlu0 %419
    %v423 = vmul.f32 %v405, %v418
    %v424 = vmul.f32 %v406, %v420
    %427 = vrot.lane.b32.xlu0 %v423, 32
    %v428 = vpop.permute.xlu0 %427
    %429 = vrot.lane.b32.xlu0 %v424, 32
    %v430 = vpop.permute.xlu0 %429
    %v433 = vadd.f32 %v413, %v428
    %v434 = vadd.f32 %v414, %v430
    %v435 = vtanh.pop %v433
    %v436 = vtanh.pop %v434
    %439 = vrot.lane.b32.xlu0 %v435, 64
    %v440 = vpop.permute.xlu0 %439
    %441 = vrot.lane.b32.xlu0 %v436, 64
    %v442 = vpop.permute.xlu0 %441
    %v445 = vmul.f32 %v405, %v440
    %v446 = vmul.f32 %v406, %v442
    %v449 = vrot.slane %v445, 1
    %v450 = vsel %vm319, %v446, %v449
    %451 = vrot.lane.b32.xlu0 %v450, 32
    %v452 = vpop.permute.xlu0 %451
    %v453 = vsel %vm196, %v452, 0
    %455 = vmatprep.subr.mxu0 0.0
    %456 = vmatpush1.msra.mxu0 0.0
    %457 = vmatprep.subr.mxu0 0.0
    %458 = vmatpush1.msra.mxu0 0.0
    %459 = vmatprep.subr.mxu0 0.0
    %460 = vmatpush1.msra.mxu0 0.0
    %461 = vmatprep.subr.mxu0 0.0
    %462 = vmatpush1.msra.mxu0 0.0
    %463 = vmatprep.subr.mxu0 0.0
    %464 = vmatpush1.msra.mxu0 0.0
    %465 = vmatprep.subr.mxu0 0.0
    %466 = vmatpush1.msra.mxu0 0.0
    %467 = vmatprep.subr.mxu0 0.0
    %468 = vmatpush1.msra.mxu0 0.0
    %469 = vmatprep.subr.mxu0 0.0
    %470 = vmatpush1.msra.mxu0 0.0
    %471 = vmatprep.subr.mxu0 0.0
    %472 = vmatpush1.msra.mxu0 0.0
    %473 = vmatprep.subr.mxu0 0.0
    %474 = vmatpush1.msra.mxu0 0.0
    %475 = vmatprep.subr.mxu0 0.0
    %476 = vmatpush1.msra.mxu0 0.0
    %477 = vmatprep.subr.mxu0 0.0
    %478 = vmatpush1.msra.mxu0 0.0
    %479 = vmatprep.subr.mxu0 0.0
    %480 = vmatpush1.msra.mxu0 %v102
    %481 = vmatprep.subr.mxu0 0.0
    %482 = vmatpush1.msra.mxu0 %v101
    %483 = vmatprep.subr.mxu0 0.0
    %484 = vmatpush1.msra.mxu0 %v100
    %485 = vmatprep.subr.mxu0 0.0
    %486 = vmatpush1.msra.mxu0 %v99
    %487 = vmatprep.subr.mxu0 0.0
    %488 = vmatpush2.msra.mxu0 0.0
    %489 = vmatprep.subr.mxu0 0.0
    %490 = vmatpush2.msra.mxu0 0.0
    %491 = vmatprep.subr.mxu0 0.0
    %492 = vmatpush2.msra.mxu0 0.0
    %493 = vmatprep.subr.mxu0 0.0
    %494 = vmatpush2.msra.mxu0 0.0
    %495 = vmatprep.subr.mxu0 0.0
    %496 = vmatpush2.msra.mxu0 0.0
    %497 = vmatprep.subr.mxu0 0.0
    %498 = vmatpush2.msra.mxu0 0.0
    %499 = vmatprep.subr.mxu0 0.0
    %500 = vmatpush2.msra.mxu0 0.0
    %501 = vmatprep.subr.mxu0 0.0
    %502 = vmatpush2.msra.mxu0 0.0
    %503 = vmatprep.subr.mxu0 0.0
    %504 = vmatpush2.msra.mxu0 0.0
    %505 = vmatprep.subr.mxu0 0.0
    %506 = vmatpush2.msra.mxu0 0.0
    %507 = vmatprep.subr.mxu0 0.0
    %508 = vmatpush2.msra.mxu0 0.0
    %509 = vmatprep.subr.mxu0 0.0
    %510 = vmatpush2.msra.mxu0 0.0
    %511 = vmatprep.subr.mxu0 0.0
    %512 = vmatpush2.msra.mxu0 0.0
    %513 = vmatprep.subr.mxu0 0.0
    %514 = vmatpush2.msra.mxu0 0.0
    %515 = vmatprep.subr.mxu0 0.0
    %516 = vmatpush2.msra.mxu0 0.0
    %517 = vmatprep.subr.mxu0 0.0
    %518 = vmatpush2.msra.mxu0 0.0
    %519 = vmatprep.mubr.f32.mxu0 0.0
    %520 = vmatmul.mubr.f32.gmra.mxu0 %v453
    %v521 = vpop.f32.mrf.mxu0
    %v522 = vadd.f32 0.0, %v521
    %v523 = vpop.f32.mrf.mxu0
    %524 = vdwg.mxu0
    %v526 = vrot.slane %v522, 6
    %v527 = vrot.slane %v522, 7
    %v530 = vadd.f32 %v188, %v526
    %v531 = vadd.f32 %v193, %v527
    %v532 = vtanh.pop %v530
    %v533 = vtanh.pop %v531
    %v534 = vmul.f32 %v532, 0.5
    %v535 = vmul.f32 %v533, 0.5
    %v536 = vadd.f32 %v534, 0.5
    %v537 = vadd.f32 %v535, 0.5
    %v540 = vrot.slane %v433, 7
    %v541 = vrot.slane %v434, 7
    %v544 = vmul.f32 %v536, %v540
    %v545 = vmul.f32 %v537, %v541
    %548 = vrot.lane.b32.xlu0 %v532, 64
    %v549 = vpop.permute.xlu0 %548
    %550 = vrot.lane.b32.xlu0 %v533, 64
    %v551 = vpop.permute.xlu0 %550
    %v554 = vmul.f32 %v536, %v549
    %v555 = vmul.f32 %v537, %v551
    %558 = vrot.lane.b32.xlu0 %v554, 32
    %v559 = vpop.permute.xlu0 %558
    %560 = vrot.lane.b32.xlu0 %v555, 32
    %v561 = vpop.permute.xlu0 %560
    %v564 = vadd.f32 %v544, %v559
    %v565 = vadd.f32 %v545, %v561
    %v566 = vtanh.pop %v564
    %v567 = vtanh.pop %v565
    %570 = vrot.lane.b32.xlu0 %v566, 64
    %v571 = vpop.permute.xlu0 %570
    %572 = vrot.lane.b32.xlu0 %v567, 64
    %v573 = vpop.permute.xlu0 %572
    %v576 = vmul.f32 %v536, %v571
    %v577 = vmul.f32 %v537, %v573
    %v580 = vrot.slane %v576, 2
    %v581 = vrot.slane %v577, 1
    %v582 = vsel %vm319, %v581, %v580
    %583 = vrot.lane.b32.xlu0 %v582, 32
    %v584 = vpop.permute.xlu0 %583
    %v585 = vsel %vm196, %v584, 0
    %587 = vmatprep.subr.mxu0 0.0
    %588 = vmatpush1.msra.mxu0 0.0
    %589 = vmatprep.subr.mxu0 0.0
    %590 = vmatpush1.msra.mxu0 0.0
    %591 = vmatprep.subr.mxu0 0.0
    %592 = vmatpush1.msra.mxu0 0.0
    %593 = vmatprep.subr.mxu0 0.0
    %594 = vmatpush1.msra.mxu0 0.0
    %595 = vmatprep.subr.mxu0 0.0
    %596 = vmatpush1.msra.mxu0 0.0
    %597 = vmatprep.subr.mxu0 0.0
    %598 = vmatpush1.msra.mxu0 0.0
    %599 = vmatprep.subr.mxu0 0.0
    %600 = vmatpush1.msra.mxu0 0.0
    %601 = vmatprep.subr.mxu0 0.0
    %602 = vmatpush1.msra.mxu0 0.0
    %603 = vmatprep.subr.mxu0 0.0
    %604 = vmatpush1.msra.mxu0 0.0
    %605 = vmatprep.subr.mxu0 0.0
    %606 = vmatpush1.msra.mxu0 0.0
    %607 = vmatprep.subr.mxu0 0.0
    %608 = vmatpush1.msra.mxu0 0.0
    %609 = vmatprep.subr.mxu0 0.0
    %610 = vmatpush1.msra.mxu0 0.0
    %611 = vmatprep.subr.mxu0 0.0
    %612 = vmatpush1.msra.mxu0 %v102
    %613 = vmatprep.subr.mxu0 0.0
    %614 = vmatpush1.msra.mxu0 %v101
    %615 = vmatprep.subr.mxu0 0.0
    %616 = vmatpush1.msra.mxu0 %v100
    %617 = vmatprep.subr.mxu0 0.0
    %618 = vmatpush1.msra.mxu0 %v99
    %619 = vmatprep.subr.mxu0 0.0
    %620 = vmatpush2.msra.mxu0 0.0
    %621 = vmatprep.subr.mxu0 0.0
    %622 = vmatpush2.msra.mxu0 0.0
    %623 = vmatprep.subr.mxu0 0.0
    %624 = vmatpush2.msra.mxu0 0.0
    %625 = vmatprep.subr.mxu0 0.0
    %626 = vmatpush2.msra.mxu0 0.0
    %627 = vmatprep.subr.mxu0 0.0
    %628 = vmatpush2.msra.mxu0 0.0
    %629 = vmatprep.subr.mxu0 0.0
    %630 = vmatpush2.msra.mxu0 0.0
    %631 = vmatprep.subr.mxu0 0.0
    %632 = vmatpush2.msra.mxu0 0.0
    %633 = vmatprep.subr.mxu0 0.0
    %634 = vmatpush2.msra.mxu0 0.0
    %635 = vmatprep.subr.mxu0 0.0
    %636 = vmatpush2.msra.mxu0 0.0
    %637 = vmatprep.subr.mxu0 0.0
    %638 = vmatpush2.msra.mxu0 0.0
    %639 = vmatprep.subr.mxu0 0.0
    %640 = vmatpush2.msra.mxu0 0.0
    %641 = vmatprep.subr.mxu0 0.0
    %642 = vmatpush2.msra.mxu0 0.0
    %643 = vmatprep.subr.mxu0 0.0
    %644 = vmatpush2.msra.mxu0 0.0
    %645 = vmatprep.subr.mxu0 0.0
    %646 = vmatpush2.msra.mxu0 0.0
    %647 = vmatprep.subr.mxu0 0.0
    %648 = vmatpush2.msra.mxu0 0.0
    %649 = vmatprep.subr.mxu0 0.0
    %650 = vmatpush2.msra.mxu0 0.0
    %651 = vmatprep.mubr.f32.mxu0 0.0
    %652 = vmatmul.mubr.f32.gmra.mxu0 %v585
    %v653 = vpop.f32.mrf.mxu0
    %v654 = vadd.f32 0.0, %v653
    %v655 = vpop.f32.mrf.mxu0
    %656 = vdwg.mxu0
    %v658 = vrot.slane %v654, 5
    %v659 = vrot.slane %v654, 6
    %v662 = vadd.f32 %v188, %v658
    %v663 = vadd.f32 %v193, %v659
    %v664 = vtanh.pop %v662
    %v665 = vtanh.pop %v663
    %v666 = vmul.f32 %v664, 0.5
    %v667 = vmul.f32 %v665, 0.5
    %v668 = vadd.f32 %v666, 0.5
    %v669 = vadd.f32 %v667, 0.5
    %v672 = vrot.slane %v564, 7
    %v673 = vrot.slane %v565, 7
    %v676 = vmul.f32 %v668, %v672
    %v677 = vmul.f32 %v669, %v673
    %680 = vrot.lane.b32.xlu0 %v664, 64
    %v681 = vpop.permute.xlu0 %680
    %682 = vrot.lane.b32.xlu0 %v665, 64
    %v683 = vpop.permute.xlu0 %682
    %v686 = vmul.f32 %v668, %v681
    %v687 = vmul.f32 %v669, %v683
    %690 = vrot.lane.b32.xlu0 %v686, 32
    %v691 = vpop.permute.xlu0 %690
    %692 = vrot.lane.b32.xlu0 %v687, 32
    %v693 = vpop.permute.xlu0 %692
    %v696 = vadd.f32 %v676, %v691
    %v697 = vadd.f32 %v677, %v693
    %v698 = vtanh.pop %v696
    %v699 = vtanh.pop %v697
    %702 = vrot.lane.b32.xlu0 %v698, 64
    %v703 = vpop.permute.xlu0 %702
    %704 = vrot.lane.b32.xlu0 %v699, 64
    %v705 = vpop.permute.xlu0 %704
    %v708 = vmul.f32 %v668, %v703
    %v709 = vmul.f32 %v669, %v705
    %v712 = vrot.slane %v708, 3
    %v713 = vrot.slane %v709, 2
    %v714 = vsel %vm319, %v713, %v712
    %715 = vrot.lane.b32.xlu0 %v714, 32
    %v716 = vpop.permute.xlu0 %715
    %v717 = vsel %vm196, %v716, 0
    %719 = vmatprep.subr.mxu0 0.0
    %720 = vmatpush1.msra.mxu0 0.0
    %721 = vmatprep.subr.mxu0 0.0
    %722 = vmatpush1.msra.mxu0 0.0
    %723 = vmatprep.subr.mxu0 0.0
    %724 = vmatpush1.msra.mxu0 0.0
    %725 = vmatprep.subr.mxu0 0.0
    %726 = vmatpush1.msra.mxu0 0.0
    %727 = vmatprep.subr.mxu0 0.0
    %728 = vmatpush1.msra.mxu0 0.0
    %729 = vmatprep.subr.mxu0 0.0
    %730 = vmatpush1.msra.mxu0 0.0
    %731 = vmatprep.subr.mxu0 0.0
    %732 = vmatpush1.msra.mxu0 0.0
    %733 = vmatprep.subr.mxu0 0.0
    %734 = vmatpush1.msra.mxu0 0.0
    %735 = vmatprep.subr.mxu0 0.0
    %736 = vmatpush1.msra.mxu0 0.0
    %737 = vmatprep.subr.mxu0 0.0
    %738 = vmatpush1.msra.mxu0 0.0
    %739 = vmatprep.subr.mxu0 0.0
    %740 = vmatpush1.msra.mxu0 0.0
    %741 = vmatprep.subr.mxu0 0.0
    %742 = vmatpush1.msra.mxu0 0.0
    %743 = vmatprep.subr.mxu0 0.0
    %744 = vmatpush1.msra.mxu0 %v102
    %745 = vmatprep.subr.mxu0 0.0
    %746 = vmatpush1.msra.mxu0 %v101
    %747 = vmatprep.subr.mxu0 0.0
    %748 = vmatpush1.msra.mxu0 %v100
    %749 = vmatprep.subr.mxu0 0.0
    %750 = vmatpush1.msra.mxu0 %v99
    %751 = vmatprep.subr.mxu0 0.0
    %752 = vmatpush2.msra.mxu0 0.0
    %753 = vmatprep.subr.mxu0 0.0
    %754 = vmatpush2.msra.mxu0 0.0
    %755 = vmatprep.subr.mxu0 0.0
    %756 = vmatpush2.msra.mxu0 0.0
    %757 = vmatprep.subr.mxu0 0.0
    %758 = vmatpush2.msra.mxu0 0.0
    %759 = vmatprep.subr.mxu0 0.0
    %760 = vmatpush2.msra.mxu0 0.0
    %761 = vmatprep.subr.mxu0 0.0
    %762 = vmatpush2.msra.mxu0 0.0
    %763 = vmatprep.subr.mxu0 0.0
    %764 = vmatpush2.msra.mxu0 0.0
    %765 = vmatprep.subr.mxu0 0.0
    %766 = vmatpush2.msra.mxu0 0.0
    %767 = vmatprep.subr.mxu0 0.0
    %768 = vmatpush2.msra.mxu0 0.0
    %769 = vmatprep.subr.mxu0 0.0
    %770 = vmatpush2.msra.mxu0 0.0
    %771 = vmatprep.subr.mxu0 0.0
    %772 = vmatpush2.msra.mxu0 0.0
    %773 = vmatprep.subr.mxu0 0.0
    %774 = vmatpush2.msra.mxu0 0.0
    %775 = vmatprep.subr.mxu0 0.0
    %776 = vmatpush2.msra.mxu0 0.0
    %777 = vmatprep.subr.mxu0 0.0
    %778 = vmatpush2.msra.mxu0 0.0
    %779 = vmatprep.subr.mxu0 0.0
    %780 = vmatpush2.msra.mxu0 0.0
    %781 = vmatprep.subr.mxu0 0.0
    %782 = vmatpush2.msra.mxu0 0.0
    %783 = vmatprep.mubr.f32.mxu0 0.0
    %784 = vmatmul.mubr.f32.gmra.mxu0 %v717
    %v785 = vpop.f32.mrf.mxu0
    %v786 = vadd.f32 0.0, %v785
    %v787 = vpop.f32.mrf.mxu0
    %788 = vdwg.mxu0
    %v790 = vrot.slane %v786, 4
    %v791 = vrot.slane %v786, 5
    %v794 = vadd.f32 %v188, %v790
    %v795 = vadd.f32 %v193, %v791
    %v796 = vtanh.pop %v794
    %v797 = vtanh.pop %v795
    %v798 = vmul.f32 %v796, 0.5
    %v799 = vmul.f32 %v797, 0.5
    %v800 = vadd.f32 %v798, 0.5
    %v801 = vadd.f32 %v799, 0.5
    %v804 = vrot.slane %v696, 7
    %v805 = vrot.slane %v697, 7
    %v808 = vmul.f32 %v800, %v804
    %v809 = vmul.f32 %v801, %v805
    %812 = vrot.lane.b32.xlu0 %v796, 64
    %v813 = vpop.permute.xlu0 %812
    %814 = vrot.lane.b32.xlu0 %v797, 64
    %v815 = vpop.permute.xlu0 %814
    %v818 = vmul.f32 %v800, %v813
    %v819 = vmul.f32 %v801, %v815
    %822 = vrot.lane.b32.xlu0 %v818, 32
    %v823 = vpop.permute.xlu0 %822
    %824 = vrot.lane.b32.xlu0 %v819, 32
    %v825 = vpop.permute.xlu0 %824
    %v828 = vadd.f32 %v808, %v823
    %v829 = vadd.f32 %v809, %v825
    %v830 = vtanh.pop %v828
    %v831 = vtanh.pop %v829
    %834 = vrot.lane.b32.xlu0 %v830, 64
    %v835 = vpop.permute.xlu0 %834
    %836 = vrot.lane.b32.xlu0 %v831, 64
    %v837 = vpop.permute.xlu0 %836
    %v840 = vmul.f32 %v800, %v835
    %v841 = vmul.f32 %v801, %v837
    %v844 = vrot.slane %v840, 4
    %v845 = vrot.slane %v841, 3
    %v846 = vsel %vm319, %v845, %v844
    %847 = vrot.lane.b32.xlu0 %v846, 32
    %v848 = vpop.permute.xlu0 %847
    %v849 = vsel %vm196, %v848, 0
    %851 = vmatprep.subr.mxu0 0.0
    %852 = vmatpush1.msra.mxu0 0.0
    %853 = vmatprep.subr.mxu0 0.0
    %854 = vmatpush1.msra.mxu0 0.0
    %855 = vmatprep.subr.mxu0 0.0
    %856 = vmatpush1.msra.mxu0 0.0
    %857 = vmatprep.subr.mxu0 0.0
    %858 = vmatpush1.msra.mxu0 0.0
    %859 = vmatprep.subr.mxu0 0.0
    %860 = vmatpush1.msra.mxu0 0.0
    %861 = vmatprep.subr.mxu0 0.0
    %862 = vmatpush1.msra.mxu0 0.0
    %863 = vmatprep.subr.mxu0 0.0
    %864 = vmatpush1.msra.mxu0 0.0
    %865 = vmatprep.subr.mxu0 0.0
    %866 = vmatpush1.msra.mxu0 0.0
    %867 = vmatprep.subr.mxu0 0.0
    %868 = vmatpush1.msra.mxu0 0.0
    %869 = vmatprep.subr.mxu0 0.0
    %870 = vmatpush1.msra.mxu0 0.0
    %871 = vmatprep.subr.mxu0 0.0
    %872 = vmatpush1.msra.mxu0 0.0
    %873 = vmatprep.subr.mxu0 0.0
    %874 = vmatpush1.msra.mxu0 0.0
    %875 = vmatprep.subr.mxu0 0.0
    %876 = vmatpush1.msra.mxu0 %v102
    %877 = vmatprep.subr.mxu0 0.0
    %878 = vmatpush1.msra.mxu0 %v101
    %879 = vmatprep.subr.mxu0 0.0
    %880 = vmatpush1.msra.mxu0 %v100
    %881 = vmatprep.subr.mxu0 0.0
    %882 = vmatpush1.msra.mxu0 %v99
    %883 = vmatprep.subr.mxu0 0.0
    %884 = vmatpush2.msra.mxu0 0.0
    %885 = vmatprep.subr.mxu0 0.0
    %886 = vmatpush2.msra.mxu0 0.0
    %887 = vmatprep.subr.mxu0 0.0
    %888 = vmatpush2.msra.mxu0 0.0
    %889 = vmatprep.subr.mxu0 0.0
    %890 = vmatpush2.msra.mxu0 0.0
    %891 = vmatprep.subr.mxu0 0.0
    %892 = vmatpush2.msra.mxu0 0.0
    %893 = vmatprep.subr.mxu0 0.0
    %894 = vmatpush2.msra.mxu0 0.0
    %895 = vmatprep.subr.mxu0 0.0
    %896 = vmatpush2.msra.mxu0 0.0
    %897 = vmatprep.subr.mxu0 0.0
    %898 = vmatpush2.msra.mxu0 0.0
    %899 = vmatprep.subr.mxu0 0.0
    %900 = vmatpush2.msra.mxu0 0.0
    %901 = vmatprep.subr.mxu0 0.0
    %902 = vmatpush2.msra.mxu0 0.0
    %903 = vmatprep.subr.mxu0 0.0
    %904 = vmatpush2.msra.mxu0 0.0
    %905 = vmatprep.subr.mxu0 0.0
    %906 = vmatpush2.msra.mxu0 0.0
    %907 = vmatprep.subr.mxu0 0.0
    %908 = vmatpush2.msra.mxu0 0.0
    %909 = vmatprep.subr.mxu0 0.0
    %910 = vmatpush2.msra.mxu0 0.0
    %911 = vmatprep.subr.mxu0 0.0
    %912 = vmatpush2.msra.mxu0 0.0
    %913 = vmatprep.subr.mxu0 0.0
    %914 = vmatpush2.msra.mxu0 0.0
    %915 = vmatprep.mubr.f32.mxu0 0.0
    %916 = vmatmul.mubr.f32.gmra.mxu0 %v849
    %v917 = vpop.f32.mrf.mxu0
    %v918 = vadd.f32 0.0, %v917
    %v919 = vpop.f32.mrf.mxu0
    %920 = vdwg.mxu0
    %v922 = vrot.slane %v918, 3
    %v923 = vrot.slane %v918, 4
    %v926 = vadd.f32 %v188, %v922
    %v927 = vadd.f32 %v193, %v923
    %v928 = vtanh.pop %v926
    %v929 = vtanh.pop %v927
    %v930 = vmul.f32 %v928, 0.5
    %v931 = vmul.f32 %v929, 0.5
    %v932 = vadd.f32 %v930, 0.5
    %v933 = vadd.f32 %v931, 0.5
    %v936 = vrot.slane %v828, 7
    %v937 = vrot.slane %v829, 7
    %v940 = vmul.f32 %v932, %v936
    %v941 = vmul.f32 %v933, %v937
    %944 = vrot.lane.b32.xlu0 %v928, 64
    %v945 = vpop.permute.xlu0 %944
    %946 = vrot.lane.b32.xlu0 %v929, 64
    %v947 = vpop.permute.xlu0 %946
    %v950 = vmul.f32 %v932, %v945
    %v951 = vmul.f32 %v933, %v947
    %954 = vrot.lane.b32.xlu0 %v950, 32
    %v955 = vpop.permute.xlu0 %954
    %956 = vrot.lane.b32.xlu0 %v951, 32
    %v957 = vpop.permute.xlu0 %956
    %v960 = vadd.f32 %v940, %v955
    %v961 = vadd.f32 %v941, %v957
    %v962 = vtanh.pop %v960
    %v963 = vtanh.pop %v961
    %966 = vrot.lane.b32.xlu0 %v962, 64
    %v967 = vpop.permute.xlu0 %966
    %968 = vrot.lane.b32.xlu0 %v963, 64
    %v969 = vpop.permute.xlu0 %968
    %v972 = vmul.f32 %v932, %v967
    %v973 = vmul.f32 %v933, %v969
    %v976 = vrot.slane %v972, 5
    %v977 = vrot.slane %v973, 4
    %v978 = vsel %vm319, %v977, %v976
    %979 = vrot.lane.b32.xlu0 %v978, 32
    %v980 = vpop.permute.xlu0 %979
    %v981 = vsel %vm196, %v980, 0
    %983 = vmatprep.subr.mxu0 0.0
    %984 = vmatpush1.msra.mxu0 0.0
    %985 = vmatprep.subr.mxu0 0.0
    %986 = vmatpush1.msra.mxu0 0.0
    %987 = vmatprep.subr.mxu0 0.0
    %988 = vmatpush1.msra.mxu0 0.0
    %989 = vmatprep.subr.mxu0 0.0
    %990 = vmatpush1.msra.mxu0 0.0
    %991 = vmatprep.subr.mxu0 0.0
    %992 = vmatpush1.msra.mxu0 0.0
    %993 = vmatprep.subr.mxu0 0.0
    %994 = vmatpush1.msra.mxu0 0.0
    %995 = vmatprep.subr.mxu0 0.0
    %996 = vmatpush1.msra.mxu0 0.0
    %997 = vmatprep.subr.mxu0 0.0
    %998 = vmatpush1.msra.mxu0 0.0
    %999 = vmatprep.subr.mxu0 0.0
    %1000 = vmatpush1.msra.mxu0 0.0
    %1001 = vmatprep.subr.mxu0 0.0
    %1002 = vmatpush1.msra.mxu0 0.0
    %1003 = vmatprep.subr.mxu0 0.0
    %1004 = vmatpush1.msra.mxu0 0.0
    %1005 = vmatprep.subr.mxu0 0.0
    %1006 = vmatpush1.msra.mxu0 0.0
    %1007 = vmatprep.subr.mxu0 0.0
    %1008 = vmatpush1.msra.mxu0 %v102
    %1009 = vmatprep.subr.mxu0 0.0
    %1010 = vmatpush1.msra.mxu0 %v101
    %1011 = vmatprep.subr.mxu0 0.0
    %1012 = vmatpush1.msra.mxu0 %v100
    %1013 = vmatprep.subr.mxu0 0.0
    %1014 = vmatpush1.msra.mxu0 %v99
    %1015 = vmatprep.subr.mxu0 0.0
    %1016 = vmatpush2.msra.mxu0 0.0
    %1017 = vmatprep.subr.mxu0 0.0
    %1018 = vmatpush2.msra.mxu0 0.0
    %1019 = vmatprep.subr.mxu0 0.0
    %1020 = vmatpush2.msra.mxu0 0.0
    %1021 = vmatprep.subr.mxu0 0.0
    %1022 = vmatpush2.msra.mxu0 0.0
    %1023 = vmatprep.subr.mxu0 0.0
    %1024 = vmatpush2.msra.mxu0 0.0
    %1025 = vmatprep.subr.mxu0 0.0
    %1026 = vmatpush2.msra.mxu0 0.0
    %1027 = vmatprep.subr.mxu0 0.0
    %1028 = vmatpush2.msra.mxu0 0.0
    %1029 = vmatprep.subr.mxu0 0.0
    %1030 = vmatpush2.msra.mxu0 0.0
    %1031 = vmatprep.subr.mxu0 0.0
    %1032 = vmatpush2.msra.mxu0 0.0
    %1033 = vmatprep.subr.mxu0 0.0
    %1034 = vmatpush2.msra.mxu0 0.0
    %1035 = vmatprep.subr.mxu0 0.0
    %1036 = vmatpush2.msra.mxu0 0.0
    %1037 = vmatprep.subr.mxu0 0.0
    %1038 = vmatpush2.msra.mxu0 0.0
    %1039 = vmatprep.subr.mxu0 0.0
    %1040 = vmatpush2.msra.mxu0 0.0
    %1041 = vmatprep.subr.mxu0 0.0
    %1042 = vmatpush2.msra.mxu0 0.0
    %1043 = vmatprep.subr.mxu0 0.0
    %1044 = vmatpush2.msra.mxu0 0.0
    %1045 = vmatprep.subr.mxu0 0.0
    %1046 = vmatpush2.msra.mxu0 0.0
    %1047 = vmatprep.mubr.f32.mxu0 0.0
    %1048 = vmatmul.mubr.f32.gmra.mxu0 %v981
    %v1049 = vpop.f32.mrf.mxu0
    %v1050 = vadd.f32 0.0, %v1049
    %v1051 = vpop.f32.mrf.mxu0
    %1052 = vdwg.mxu0
    %v1054 = vrot.slane %v1050, 2
    %v1055 = vrot.slane %v1050, 3
    %v1058 = vadd.f32 %v188, %v1054
    %v1059 = vadd.f32 %v193, %v1055
    %v1060 = vtanh.pop %v1058
    %v1061 = vtanh.pop %v1059
    %v1062 = vmul.f32 %v1060, 0.5
    %v1063 = vmul.f32 %v1061, 0.5
    %v1064 = vadd.f32 %v1062, 0.5
    %v1065 = vadd.f32 %v1063, 0.5
    %v1068 = vrot.slane %v960, 7
    %v1069 = vrot.slane %v961, 7
    %v1072 = vmul.f32 %v1064, %v1068
    %v1073 = vmul.f32 %v1065, %v1069
    %1076 = vrot.lane.b32.xlu0 %v1060, 64
    %v1077 = vpop.permute.xlu0 %1076
    %1078 = vrot.lane.b32.xlu0 %v1061, 64
    %v1079 = vpop.permute.xlu0 %1078
    %v1082 = vmul.f32 %v1064, %v1077
    %v1083 = vmul.f32 %v1065, %v1079
    %1086 = vrot.lane.b32.xlu0 %v1082, 32
    %v1087 = vpop.permute.xlu0 %1086
    %1088 = vrot.lane.b32.xlu0 %v1083, 32
    %v1089 = vpop.permute.xlu0 %1088
    %v1092 = vadd.f32 %v1072, %v1087
    %v1093 = vadd.f32 %v1073, %v1089
    %v1094 = vtanh.pop %v1092
    %v1095 = vtanh.pop %v1093
    %1098 = vrot.lane.b32.xlu0 %v1094, 64
    %v1099 = vpop.permute.xlu0 %1098
    %1100 = vrot.lane.b32.xlu0 %v1095, 64
    %v1101 = vpop.permute.xlu0 %1100
    %v1104 = vmul.f32 %v1064, %v1099
    %v1105 = vmul.f32 %v1065, %v1101
    %v1108 = vrot.slane %v1104, 6
    %v1109 = vrot.slane %v1105, 5
    %v1110 = vsel %vm319, %v1109, %v1108
    %1111 = vrot.lane.b32.xlu0 %v1110, 32
    %v1112 = vpop.permute.xlu0 %1111
    %v1113 = vsel %vm196, %v1112, 0
    %1115 = vmatprep.subr.mxu0 0.0
    %1116 = vmatpush1.msra.mxu0 0.0
    %1117 = vmatprep.subr.mxu0 0.0
    %1118 = vmatpush1.msra.mxu0 0.0
    %1119 = vmatprep.subr.mxu0 0.0
    %1120 = vmatpush1.msra.mxu0 0.0
    %1121 = vmatprep.subr.mxu0 0.0
    %1122 = vmatpush1.msra.mxu0 0.0
    %1123 = vmatprep.subr.mxu0 0.0
    %1124 = vmatpush1.msra.mxu0 0.0
    %1125 = vmatprep.subr.mxu0 0.0
    %1126 = vmatpush1.msra.mxu0 0.0
    %1127 = vmatprep.subr.mxu0 0.0
    %1128 = vmatpush1.msra.mxu0 0.0
    %1129 = vmatprep.subr.mxu0 0.0
    %1130 = vmatpush1.msra.mxu0 0.0
    %1131 = vmatprep.subr.mxu0 0.0
    %1132 = vmatpush1.msra.mxu0 0.0
    %1133 = vmatprep.subr.mxu0 0.0
    %1134 = vmatpush1.msra.mxu0 0.0
    %1135 = vmatprep.subr.mxu0 0.0
    %1136 = vmatpush1.msra.mxu0 0.0
    %1137 = vmatprep.subr.mxu0 0.0
    %1138 = vmatpush1.msra.mxu0 0.0
    %1139 = vmatprep.subr.mxu0 0.0
    %1140 = vmatpush1.msra.mxu0 %v102
    %1141 = vmatprep.subr.mxu0 0.0
    %1142 = vmatpush1.msra.mxu0 %v101
    %1143 = vmatprep.subr.mxu0 0.0
    %1144 = vmatpush1.msra.mxu0 %v100
    %1145 = vmatprep.subr.mxu0 0.0
    %1146 = vmatpush1.msra.mxu0 %v99
    %1147 = vmatprep.subr.mxu0 0.0
    %1148 = vmatpush2.msra.mxu0 0.0
    %1149 = vmatprep.subr.mxu0 0.0
    %1150 = vmatpush2.msra.mxu0 0.0
    %1151 = vmatprep.subr.mxu0 0.0
    %1152 = vmatpush2.msra.mxu0 0.0
    %1153 = vmatprep.subr.mxu0 0.0
    %1154 = vmatpush2.msra.mxu0 0.0
    %1155 = vmatprep.subr.mxu0 0.0
    %1156 = vmatpush2.msra.mxu0 0.0
    %1157 = vmatprep.subr.mxu0 0.0
    %1158 = vmatpush2.msra.mxu0 0.0
    %1159 = vmatprep.subr.mxu0 0.0
    %1160 = vmatpush2.msra.mxu0 0.0
    %1161 = vmatprep.subr.mxu0 0.0
    %1162 = vmatpush2.msra.mxu0 0.0
    %1163 = vmatprep.subr.mxu0 0.0
    %1164 = vmatpush2.msra.mxu0 0.0
    %1165 = vmatprep.subr.mxu0 0.0
    %1166 = vmatpush2.msra.mxu0 0.0
    %1167 = vmatprep.subr.mxu0 0.0
    %1168 = vmatpush2.msra.mxu0 0.0
    %1169 = vmatprep.subr.mxu0 0.0
    %1170 = vmatpush2.msra.mxu0 0.0
    %1171 = vmatprep.subr.mxu0 0.0
    %1172 = vmatpush2.msra.mxu0 0.0
    %1173 = vmatprep.subr.mxu0 0.0
    %1174 = vmatpush2.msra.mxu0 0.0
    %1175 = vmatprep.subr.mxu0 0.0
    %1176 = vmatpush2.msra.mxu0 0.0
    %1177 = vmatprep.subr.mxu0 0.0
    %1178 = vmatpush2.msra.mxu0 0.0
    %1179 = vmatprep.mubr.f32.mxu0 0.0
    %1180 = vmatmul.mubr.f32.gmra.mxu0 %v1113
    %v1181 = vpop.f32.mrf.mxu0
    %v1182 = vadd.f32 0.0, %v1181
    %v1183 = vpop.f32.mrf.mxu0
    %1184 = vdwg.mxu0
    %v1186 = vrot.slane %v1182, 1
    %v1187 = vrot.slane %v1182, 2
    %v1190 = vadd.f32 %v188, %v1186
    %v1191 = vadd.f32 %v193, %v1187
    %v1192 = vtanh.pop %v1190
    %v1193 = vtanh.pop %v1191
    %v1194 = vmul.f32 %v1192, 0.5
    %v1195 = vmul.f32 %v1193, 0.5
    %v1196 = vadd.f32 %v1194, 0.5
    %v1197 = vadd.f32 %v1195, 0.5
    %v1200 = vrot.slane %v1092, 7
    %v1201 = vrot.slane %v1093, 7
    %v1204 = vmul.f32 %v1196, %v1200
    %v1205 = vmul.f32 %v1197, %v1201
    %1208 = vrot.lane.b32.xlu0 %v1192, 64
    %v1209 = vpop.permute.xlu0 %1208
    %1210 = vrot.lane.b32.xlu0 %v1193, 64
    %v1211 = vpop.permute.xlu0 %1210
    %v1214 = vmul.f32 %v1196, %v1209
    %v1215 = vmul.f32 %v1197, %v1211
    %1218 = vrot.lane.b32.xlu0 %v1214, 32
    %v1219 = vpop.permute.xlu0 %1218
    %1220 = vrot.lane.b32.xlu0 %v1215, 32
    %v1221 = vpop.permute.xlu0 %1220
    %v1224 = vadd.f32 %v1204, %v1219
    %v1225 = vadd.f32 %v1205, %v1221
    %v1226 = vtanh.pop %v1224
    %v1227 = vtanh.pop %v1225
    %1230 = vrot.lane.b32.xlu0 %v1226, 64
    %v1231 = vpop.permute.xlu0 %1230
    %1232 = vrot.lane.b32.xlu0 %v1227, 64
    %v1233 = vpop.permute.xlu0 %1232
    %v1236 = vmul.f32 %v1196, %v1231
    %v1237 = vmul.f32 %v1197, %v1233
    %vm1238 = vcmask 1040384
    %v1239 = vsel %vm1238, %v314, %v445
    %v1240 = vsel %vm1238, %v315, %v446
    %vm1241 = vcmask 1041408
    %v1242 = vsel %vm1241, %v1239, %v576
    %v1243 = vsel %vm1241, %v1240, %v577
    %vm1244 = vcmask 1042432
    %v1245 = vsel %vm1244, %v1242, %v708
    %v1246 = vsel %vm1244, %v1243, %v709
    %v1247 = vsel %vm117, %v1245, %v840
    %v1248 = vsel %vm117, %v1246, %v841
    %vm1249 = vcmask 1044480
    %v1250 = vsel %vm1249, %v1247, %v972
    %v1251 = vsel %vm1249, %v1248, %v973
    %vm1252 = vcmask 1045504
    %v1253 = vsel %vm1252, %v1250, %v1104
    %v1254 = vsel %vm1252, %v1251, %v1105
    %vm1255 = vcmask 1046528
    %v1256 = vsel %vm1255, %v1253, %v1236
    %v1257 = vsel %vm1255, %v1254, %v1237
    %v1258 = vld [vmem:[#allocation6] sm:$0xff]
    %v1259 = vld [vmem:[#allocation6 + $0x8] sm:$0xff]
    %v1260 = vld [vmem:[#allocation6 + $0x10] sm:$0xff]
    %v1261 = vld [vmem:[#allocation6 + $0x18] sm:$0xff]
    %v1262 = vld [vmem:[#allocation7] sm:$0xff]
    %v1263 = vld [vmem:[#allocation7 + $0x8] sm:$0xff]
    %v1264 = vld [vmem:[#allocation7 + $0x10] sm:$0xff]
    %v1265 = vld [vmem:[#allocation7 + $0x18] sm:$0xff]
    %v1266 = vld [vmem:[#allocation9] sm:$0x1]
    %v1268 = vlaneseq
    %v1269 = vshrl.u32 %v1268, 7
    %v1270 = vsub.s32 0, %v1269
    %v1271 = vrot.slane %v1266, %v1270
    %1275 = vrot.lane.b32.xlu0 %v1256, 32
    %v1276 = vpop.permute.xlu0 %1275
    %1277 = vrot.lane.b32.xlu0 %v1257, 32
    %v1278 = vpop.permute.xlu0 %1277
    %v1279 = vsel %vm196, %v1276, 0
    %v1281 = vsel %vm196, %v1278, 0
    %1283 = vmatprep.subr.mxu0 0.0
    %1284 = vmatpush1.msra.mxu0 0.0
    %1285 = vmatprep.subr.mxu0 0.0
    %1286 = vmatpush1.msra.mxu0 0.0
    %1287 = vmatprep.subr.mxu0 0.0
    %1288 = vmatpush1.msra.mxu0 0.0
    %1289 = vmatprep.subr.mxu0 0.0
    %1290 = vmatpush1.msra.mxu0 0.0
    %1291 = vmatprep.subr.mxu0 0.0
    %1292 = vmatpush1.msra.mxu0 0.0
    %1293 = vmatprep.subr.mxu0 0.0
    %1294 = vmatpush1.msra.mxu0 0.0
    %1295 = vmatprep.subr.mxu0 0.0
    %1296 = vmatpush1.msra.mxu0 0.0
    %1297 = vmatprep.subr.mxu0 0.0
    %1298 = vmatpush1.msra.mxu0 0.0
    %1299 = vmatprep.subr.mxu0 0.0
    %1300 = vmatpush1.msra.mxu0 0.0
    %1301 = vmatprep.subr.mxu0 0.0
    %1302 = vmatpush1.msra.mxu0 0.0
    %1303 = vmatprep.subr.mxu0 0.0
    %1304 = vmatpush1.msra.mxu0 0.0
    %1305 = vmatprep.subr.mxu0 0.0
    %1306 = vmatpush1.msra.mxu0 0.0
    %1307 = vmatprep.subr.mxu0 0.0
    %1308 = vmatpush1.msra.mxu0 %v1261
    %1309 = vmatprep.subr.mxu0 0.0
    %1310 = vmatpush1.msra.mxu0 %v1260
    %1311 = vmatprep.subr.mxu0 0.0
    %1312 = vmatpush1.msra.mxu0 %v1259
    %1313 = vmatprep.subr.mxu0 0.0
    %1314 = vmatpush1.msra.mxu0 %v1258
    %1315 = vmatprep.subr.mxu0 0.0
    %1316 = vmatpush2.msra.mxu0 0.0
    %1317 = vmatprep.subr.mxu0 0.0
    %1318 = vmatpush2.msra.mxu0 0.0
    %1319 = vmatprep.subr.mxu0 0.0
    %1320 = vmatpush2.msra.mxu0 0.0
    %1321 = vmatprep.subr.mxu0 0.0
    %1322 = vmatpush2.msra.mxu0 0.0
    %1323 = vmatprep.subr.mxu0 0.0
    %1324 = vmatpush2.msra.mxu0 0.0
    %1325 = vmatprep.subr.mxu0 0.0
    %1326 = vmatpush2.msra.mxu0 0.0
    %1327 = vmatprep.subr.mxu0 0.0
    %1328 = vmatpush2.msra.mxu0 0.0
    %1329 = vmatprep.subr.mxu0 0.0
    %1330 = vmatpush2.msra.mxu0 0.0
    %1331 = vmatprep.subr.mxu0 0.0
    %1332 = vmatpush2.msra.mxu0 0.0
    %1333 = vmatprep.subr.mxu0 0.0
    %1334 = vmatpush2.msra.mxu0 0.0
    %1335 = vmatprep.subr.mxu0 0.0
    %1336 = vmatpush2.msra.mxu0 0.0
    %1337 = vmatprep.subr.mxu0 0.0
    %1338 = vmatpush2.msra.mxu0 0.0
    %1339 = vmatprep.subr.mxu0 0.0
    %1340 = vmatpush2.msra.mxu0 0.0
    %1341 = vmatprep.subr.mxu0 0.0
    %1342 = vmatpush2.msra.mxu0 0.0
    %1343 = vmatprep.subr.mxu0 0.0
    %1344 = vmatpush2.msra.mxu0 0.0
    %1345 = vmatprep.subr.mxu0 0.0
    %1346 = vmatpush2.msra.mxu0 0.0
    %1347 = vmatprep.mubr.f32.mxu0 0.0
    %1348 = vmatmul.mubr.f32.gmra.mxu0 %v1279
    %v1349 = vpop.f32.mrf.mxu0
    %v1350 = vadd.f32 %v1271, %v1349
    %v1351 = vpop.f32.mrf.mxu0
    %1352 = vmatprep.mubr.f32.mxu0 0.0
    %1353 = vmatmul.mubr.f32.gmra.mxu0 %v1281
    %v1354 = vpop.f32.mrf.mxu0
    %v1355 = vadd.f32 %v1271, %v1354
    %v1356 = vpop.f32.mrf.mxu0
    %1357 = vdwg.mxu0
    %1358 = vmatprep.subr.mxu0 0.0
    %1359 = vmatpush1.msra.mxu0 0.0
    %1360 = vmatprep.subr.mxu0 0.0
    %1361 = vmatpush1.msra.mxu0 0.0
    %1362 = vmatprep.subr.mxu0 0.0
    %1363 = vmatpush1.msra.mxu0 0.0
    %1364 = vmatprep.subr.mxu0 0.0
    %1365 = vmatpush1.msra.mxu0 0.0
    %1366 = vmatprep.subr.mxu0 0.0
    %1367 = vmatpush1.msra.mxu0 0.0
    %1368 = vmatprep.subr.mxu0 0.0
    %1369 = vmatpush1.msra.mxu0 0.0
    %1370 = vmatprep.subr.mxu0 0.0
    %1371 = vmatpush1.msra.mxu0 0.0
    %1372 = vmatprep.subr.mxu0 0.0
    %1373 = vmatpush1.msra.mxu0 0.0
    %1374 = vmatprep.subr.mxu0 0.0
    %1375 = vmatpush1.msra.mxu0 0.0
    %1376 = vmatprep.subr.mxu0 0.0
    %1377 = vmatpush1.msra.mxu0 0.0
    %1378 = vmatprep.subr.mxu0 0.0
    %1379 = vmatpush1.msra.mxu0 0.0
    %1380 = vmatprep.subr.mxu0 0.0
    %1381 = vmatpush1.msra.mxu0 0.0
    %1382 = vmatprep.subr.mxu0 0.0
    %1383 = vmatpush1.msra.mxu0 %v1265
    %1384 = vmatprep.subr.mxu0 0.0
    %1385 = vmatpush1.msra.mxu0 %v1264
    %1386 = vmatprep.subr.mxu0 0.0
    %1387 = vmatpush1.msra.mxu0 %v1263
    %1388 = vmatprep.subr.mxu0 0.0
    %1389 = vmatpush1.msra.mxu0 %v1262
    %1390 = vmatprep.subr.mxu0 0.0
    %1391 = vmatpush2.msra.mxu0 0.0
    %1392 = vmatprep.subr.mxu0 0.0
    %1393 = vmatpush2.msra.mxu0 0.0
    %1394 = vmatprep.subr.mxu0 0.0
    %1395 = vmatpush2.msra.mxu0 0.0
    %1396 = vmatprep.subr.mxu0 0.0
    %1397 = vmatpush2.msra.mxu0 0.0
    %1398 = vmatprep.subr.mxu0 0.0
    %1399 = vmatpush2.msra.mxu0 0.0
    %1400 = vmatprep.subr.mxu0 0.0
    %1401 = vmatpush2.msra.mxu0 0.0
    %1402 = vmatprep.subr.mxu0 0.0
    %1403 = vmatpush2.msra.mxu0 0.0
    %1404 = vmatprep.subr.mxu0 0.0
    %1405 = vmatpush2.msra.mxu0 0.0
    %1406 = vmatprep.subr.mxu0 0.0
    %1407 = vmatpush2.msra.mxu0 0.0
    %1408 = vmatprep.subr.mxu0 0.0
    %1409 = vmatpush2.msra.mxu0 0.0
    %1410 = vmatprep.subr.mxu0 0.0
    %1411 = vmatpush2.msra.mxu0 0.0
    %1412 = vmatprep.subr.mxu0 0.0
    %1413 = vmatpush2.msra.mxu0 0.0
    %1414 = vmatprep.subr.mxu0 0.0
    %1415 = vmatpush2.msra.mxu0 0.0
    %1416 = vmatprep.subr.mxu0 0.0
    %1417 = vmatpush2.msra.mxu0 0.0
    %1418 = vmatprep.subr.mxu0 0.0
    %1419 = vmatpush2.msra.mxu0 0.0
    %1420 = vmatprep.subr.mxu0 0.0
    %1421 = vmatpush2.msra.mxu0 0.0
    %1422 = vmatprep.mubr.f32.mxu0 0.0
    %1423 = vmatmul.mubr.f32.gmra.mxu0 %v198
    %v1424 = vpop.f32.mrf.mxu0
    %v1425 = vadd.f32 0.0, %v1424
    %v1426 = vpop.f32.mrf.mxu0
    %1427 = vdwg.mxu0
    %v1429 = vrot.slane %v1425, 1
    %v1432 = vadd.f32 %v1350, %v1425
    %v1433 = vadd.f32 %v1355, %v1429
    %v1434 = vtanh.pop %v1432
    %v1435 = vtanh.pop %v1433
    %v1436 = vmul.f32 %v1434, 0.5
    %v1437 = vmul.f32 %v1435, 0.5
    %v1438 = vadd.f32 %v1436, 0.5
    %v1439 = vadd.f32 %v1437, 0.5
    %v1440 = vmul.f32 %v1438, 0.0
    %v1441 = vmul.f32 %v1439, 0.0
    %1444 = vrot.lane.b32.xlu0 %v1434, 64
    %v1445 = vpop.permute.xlu0 %1444
    %1446 = vrot.lane.b32.xlu0 %v1435, 64
    %v1447 = vpop.permute.xlu0 %1446
    %v1450 = vmul.f32 %v1438, %v1445
    %v1451 = vmul.f32 %v1439, %v1447
    %1454 = vrot.lane.b32.xlu0 %v1450, 32
    %v1455 = vpop.permute.xlu0 %1454
    %1456 = vrot.lane.b32.xlu0 %v1451, 32
    %v1457 = vpop.permute.xlu0 %1456
    %v1460 = vadd.f32 %v1440, %v1455
    %v1461 = vadd.f32 %v1441, %v1457
    %v1462 = vtanh.pop %v1460
    %v1463 = vtanh.pop %v1461
    %1466 = vrot.lane.b32.xlu0 %v1462, 64
    %v1467 = vpop.permute.xlu0 %1466
    %1468 = vrot.lane.b32.xlu0 %v1463, 64
    %v1469 = vpop.permute.xlu0 %1468
    %v1472 = vmul.f32 %v1438, %v1467
    %v1473 = vmul.f32 %v1439, %v1469
    %v1476 = vrot.slane %v1473, 7
    %v1477 = vsel %vm319, %v1476, %v1472
    %1478 = vrot.lane.b32.xlu0 %v1477, 32
    %v1479 = vpop.permute.xlu0 %1478
    %v1480 = vsel %vm196, %v1479, 0
    %1482 = vmatprep.subr.mxu0 0.0
    %1483 = vmatpush1.msra.mxu0 0.0
    %1484 = vmatprep.subr.mxu0 0.0
    %1485 = vmatpush1.msra.mxu0 0.0
    %1486 = vmatprep.subr.mxu0 0.0
    %1487 = vmatpush1.msra.mxu0 0.0
    %1488 = vmatprep.subr.mxu0 0.0
    %1489 = vmatpush1.msra.mxu0 0.0
    %1490 = vmatprep.subr.mxu0 0.0
    %1491 = vmatpush1.msra.mxu0 0.0
    %1492 = vmatprep.subr.mxu0 0.0
    %1493 = vmatpush1.msra.mxu0 0.0
    %1494 = vmatprep.subr.mxu0 0.0
    %1495 = vmatpush1.msra.mxu0 0.0
    %1496 = vmatprep.subr.mxu0 0.0
    %1497 = vmatpush1.msra.mxu0 0.0
    %1498 = vmatprep.subr.mxu0 0.0
    %1499 = vmatpush1.msra.mxu0 0.0
    %1500 = vmatprep.subr.mxu0 0.0
    %1501 = vmatpush1.msra.mxu0 0.0
    %1502 = vmatprep.subr.mxu0 0.0
    %1503 = vmatpush1.msra.mxu0 0.0
    %1504 = vmatprep.subr.mxu0 0.0
    %1505 = vmatpush1.msra.mxu0 0.0
    %1506 = vmatprep.subr.mxu0 0.0
    %1507 = vmatpush1.msra.mxu0 %v1265
    %1508 = vmatprep.subr.mxu0 0.0
    %1509 = vmatpush1.msra.mxu0 %v1264
    %1510 = vmatprep.subr.mxu0 0.0
    %1511 = vmatpush1.msra.mxu0 %v1263
    %1512 = vmatprep.subr.mxu0 0.0
    %1513 = vmatpush1.msra.mxu0 %v1262
    %1514 = vmatprep.subr.mxu0 0.0
    %1515 = vmatpush2.msra.mxu0 0.0
    %1516 = vmatprep.subr.mxu0 0.0
    %1517 = vmatpush2.msra.mxu0 0.0
    %1518 = vmatprep.subr.mxu0 0.0
    %1519 = vmatpush2.msra.mxu0 0.0
    %1520 = vmatprep.subr.mxu0 0.0
    %1521 = vmatpush2.msra.mxu0 0.0
    %1522 = vmatprep.subr.mxu0 0.0
    %1523 = vmatpush2.msra.mxu0 0.0
    %1524 = vmatprep.subr.mxu0 0.0
    %1525 = vmatpush2.msra.mxu0 0.0
    %1526 = vmatprep.subr.mxu0 0.0
    %1527 = vmatpush2.msra.mxu0 0.0
    %1528 = vmatprep.subr.mxu0 0.0
    %1529 = vmatpush2.msra.mxu0 0.0
    %1530 = vmatprep.subr.mxu0 0.0
    %1531 = vmatpush2.msra.mxu0 0.0
    %1532 = vmatprep.subr.mxu0 0.0
    %1533 = vmatpush2.msra.mxu0 0.0
    %1534 = vmatprep.subr.mxu0 0.0
    %1535 = vmatpush2.msra.mxu0 0.0
    %1536 = vmatprep.subr.mxu0 0.0
    %1537 = vmatpush2.msra.mxu0 0.0
    %1538 = vmatprep.subr.mxu0 0.0
    %1539 = vmatpush2.msra.mxu0 0.0
    %1540 = vmatprep.subr.mxu0 0.0
    %1541 = vmatpush2.msra.mxu0 0.0
    %1542 = vmatprep.subr.mxu0 0.0
    %1543 = vmatpush2.msra.mxu0 0.0
    %1544 = vmatprep.subr.mxu0 0.0
    %1545 = vmatpush2.msra.mxu0 0.0
    %1546 = vmatprep.mubr.f32.mxu0 0.0
    %1547 = vmatmul.mubr.f32.gmra.mxu0 %v1480
    %v1548 = vpop.f32.mrf.mxu0
    %v1549 = vadd.f32 0.0, %v1548
    %v1550 = vpop.f32.mrf.mxu0
    %1551 = vdwg.mxu0
    %v1553 = vrot.slane %v1549, 7
    %v1556 = vadd.f32 %v1350, %v1553
    %v1557 = vadd.f32 %v1355, %v1549
    %v1558 = vtanh.pop %v1556
    %v1559 = vtanh.pop %v1557
    %v1560 = vmul.f32 %v1558, 0.5
    %v1561 = vmul.f32 %v1559, 0.5
    %v1562 = vadd.f32 %v1560, 0.5
    %v1563 = vadd.f32 %v1561, 0.5
    %v1566 = vrot.slane %v1460, 7
    %v1567 = vrot.slane %v1461, 7
    %v1570 = vmul.f32 %v1562, %v1566
    %v1571 = vmul.f32 %v1563, %v1567
    %1574 = vrot.lane.b32.xlu0 %v1558, 64
    %v1575 = vpop.permute.xlu0 %1574
    %1576 = vrot.lane.b32.xlu0 %v1559, 64
    %v1577 = vpop.permute.xlu0 %1576
    %v1580 = vmul.f32 %v1562, %v1575
    %v1581 = vmul.f32 %v1563, %v1577
    %1584 = vrot.lane.b32.xlu0 %v1580, 32
    %v1585 = vpop.permute.xlu0 %1584
    %1586 = vrot.lane.b32.xlu0 %v1581, 32
    %v1587 = vpop.permute.xlu0 %1586
    %v1590 = vadd.f32 %v1570, %v1585
    %v1591 = vadd.f32 %v1571, %v1587
    %v1592 = vtanh.pop %v1590
    %v1593 = vtanh.pop %v1591
    %1596 = vrot.lane.b32.xlu0 %v1592, 64
    %v1597 = vpop.permute.xlu0 %1596
    %1598 = vrot.lane.b32.xlu0 %v1593, 64
    %v1599 = vpop.permute.xlu0 %1598
    %v1602 = vmul.f32 %v1562, %v1597
    %v1603 = vmul.f32 %v1563, %v1599
    %v1606 = vrot.slane %v1602, 1
    %v1607 = vsel %vm319, %v1603, %v1606
    %1608 = vrot.lane.b32.xlu0 %v1607, 32
    %v1609 = vpop.permute.xlu0 %1608
    %v1610 = vsel %vm196, %v1609, 0
    %1612 = vmatprep.subr.mxu0 0.0
    %1613 = vmatpush1.msra.mxu0 0.0
    %1614 = vmatprep.subr.mxu0 0.0
    %1615 = vmatpush1.msra.mxu0 0.0
    %1616 = vmatprep.subr.mxu0 0.0
    %1617 = vmatpush1.msra.mxu0 0.0
    %1618 = vmatprep.subr.mxu0 0.0
    %1619 = vmatpush1.msra.mxu0 0.0
    %1620 = vmatprep.subr.mxu0 0.0
    %1621 = vmatpush1.msra.mxu0 0.0
    %1622 = vmatprep.subr.mxu0 0.0
    %1623 = vmatpush1.msra.mxu0 0.0
    %1624 = vmatprep.subr.mxu0 0.0
    %1625 = vmatpush1.msra.mxu0 0.0
    %1626 = vmatprep.subr.mxu0 0.0
    %1627 = vmatpush1.msra.mxu0 0.0
    %1628 = vmatprep.subr.mxu0 0.0
    %1629 = vmatpush1.msra.mxu0 0.0
    %1630 = vmatprep.subr.mxu0 0.0
    %1631 = vmatpush1.msra.mxu0 0.0
    %1632 = vmatprep.subr.mxu0 0.0
    %1633 = vmatpush1.msra.mxu0 0.0
    %1634 = vmatprep.subr.mxu0 0.0
    %1635 = vmatpush1.msra.mxu0 0.0
    %1636 = vmatprep.subr.mxu0 0.0
    %1637 = vmatpush1.msra.mxu0 %v1265
    %1638 = vmatprep.subr.mxu0 0.0
    %1639 = vmatpush1.msra.mxu0 %v1264
    %1640 = vmatprep.subr.mxu0 0.0
    %1641 = vmatpush1.msra.mxu0 %v1263
    %1642 = vmatprep.subr.mxu0 0.0
    %1643 = vmatpush1.msra.mxu0 %v1262
    %1644 = vmatprep.subr.mxu0 0.0
    %1645 = vmatpush2.msra.mxu0 0.0
    %1646 = vmatprep.subr.mxu0 0.0
    %1647 = vmatpush2.msra.mxu0 0.0
    %1648 = vmatprep.subr.mxu0 0.0
    %1649 = vmatpush2.msra.mxu0 0.0
    %1650 = vmatprep.subr.mxu0 0.0
    %1651 = vmatpush2.msra.mxu0 0.0
    %1652 = vmatprep.subr.mxu0 0.0
    %1653 = vmatpush2.msra.mxu0 0.0
    %1654 = vmatprep.subr.mxu0 0.0
    %1655 = vmatpush2.msra.mxu0 0.0
    %1656 = vmatprep.subr.mxu0 0.0
    %1657 = vmatpush2.msra.mxu0 0.0
    %1658 = vmatprep.subr.mxu0 0.0
    %1659 = vmatpush2.msra.mxu0 0.0
    %1660 = vmatprep.subr.mxu0 0.0
    %1661 = vmatpush2.msra.mxu0 0.0
    %1662 = vmatprep.subr.mxu0 0.0
    %1663 = vmatpush2.msra.mxu0 0.0
    %1664 = vmatprep.subr.mxu0 0.0
    %1665 = vmatpush2.msra.mxu0 0.0
    %1666 = vmatprep.subr.mxu0 0.0
    %1667 = vmatpush2.msra.mxu0 0.0
    %1668 = vmatprep.subr.mxu0 0.0
    %1669 = vmatpush2.msra.mxu0 0.0
    %1670 = vmatprep.subr.mxu0 0.0
    %1671 = vmatpush2.msra.mxu0 0.0
    %1672 = vmatprep.subr.mxu0 0.0
    %1673 = vmatpush2.msra.mxu0 0.0
    %1674 = vmatprep.subr.mxu0 0.0
    %1675 = vmatpush2.msra.mxu0 0.0
    %1676 = vmatprep.mubr.f32.mxu0 0.0
    %1677 = vmatmul.mubr.f32.gmra.mxu0 %v1610
    %v1678 = vpop.f32.mrf.mxu0
    %v1679 = vadd.f32 0.0, %v1678
    %v1680 = vpop.f32.mrf.mxu0
    %1681 = vdwg.mxu0
    %v1683 = vrot.slane %v1679, 6
    %v1684 = vrot.slane %v1679, 7
    %v1687 = vadd.f32 %v1350, %v1683
    %v1688 = vadd.f32 %v1355, %v1684
    %v1689 = vtanh.pop %v1687
    %v1690 = vtanh.pop %v1688
    %v1691 = vmul.f32 %v1689, 0.5
    %v1692 = vmul.f32 %v1690, 0.5
    %v1693 = vadd.f32 %v1691, 0.5
    %v1694 = vadd.f32 %v1692, 0.5
    %v1697 = vrot.slane %v1590, 7
    %v1698 = vrot.slane %v1591, 7
    %v1701 = vmul.f32 %v1693, %v1697
    %v1702 = vmul.f32 %v1694, %v1698
    %1705 = vrot.lane.b32.xlu0 %v1689, 64
    %v1706 = vpop.permute.xlu0 %1705
    %1707 = vrot.lane.b32.xlu0 %v1690, 64
    %v1708 = vpop.permute.xlu0 %1707
    %v1711 = vmul.f32 %v1693, %v1706
    %v1712 = vmul.f32 %v1694, %v1708
    %1715 = vrot.lane.b32.xlu0 %v1711, 32
    %v1716 = vpop.permute.xlu0 %1715
    %1717 = vrot.lane.b32.xlu0 %v1712, 32
    %v1718 = vpop.permute.xlu0 %1717
    %v1721 = vadd.f32 %v1701, %v1716
    %v1722 = vadd.f32 %v1702, %v1718
    %v1723 = vtanh.pop %v1721
    %v1724 = vtanh.pop %v1722
    %1727 = vrot.lane.b32.xlu0 %v1723, 64
    %v1728 = vpop.permute.xlu0 %1727
    %1729 = vrot.lane.b32.xlu0 %v1724, 64
    %v1730 = vpop.permute.xlu0 %1729
    %v1733 = vmul.f32 %v1693, %v1728
    %v1734 = vmul.f32 %v1694, %v1730
    %v1737 = vrot.slane %v1733, 2
    %v1738 = vrot.slane %v1734, 1
    %v1739 = vsel %vm319, %v1738, %v1737
    %1740 = vrot.lane.b32.xlu0 %v1739, 32
    %v1741 = vpop.permute.xlu0 %1740
    %v1742 = vsel %vm196, %v1741, 0
    %1744 = vmatprep.subr.mxu0 0.0
    %1745 = vmatpush1.msra.mxu0 0.0
    %1746 = vmatprep.subr.mxu0 0.0
    %1747 = vmatpush1.msra.mxu0 0.0
    %1748 = vmatprep.subr.mxu0 0.0
    %1749 = vmatpush1.msra.mxu0 0.0
    %1750 = vmatprep.subr.mxu0 0.0
    %1751 = vmatpush1.msra.mxu0 0.0
    %1752 = vmatprep.subr.mxu0 0.0
    %1753 = vmatpush1.msra.mxu0 0.0
    %1754 = vmatprep.subr.mxu0 0.0
    %1755 = vmatpush1.msra.mxu0 0.0
    %1756 = vmatprep.subr.mxu0 0.0
    %1757 = vmatpush1.msra.mxu0 0.0
    %1758 = vmatprep.subr.mxu0 0.0
    %1759 = vmatpush1.msra.mxu0 0.0
    %1760 = vmatprep.subr.mxu0 0.0
    %1761 = vmatpush1.msra.mxu0 0.0
    %1762 = vmatprep.subr.mxu0 0.0
    %1763 = vmatpush1.msra.mxu0 0.0
    %1764 = vmatprep.subr.mxu0 0.0
    %1765 = vmatpush1.msra.mxu0 0.0
    %1766 = vmatprep.subr.mxu0 0.0
    %1767 = vmatpush1.msra.mxu0 0.0
    %1768 = vmatprep.subr.mxu0 0.0
    %1769 = vmatpush1.msra.mxu0 %v1265
    %1770 = vmatprep.subr.mxu0 0.0
    %1771 = vmatpush1.msra.mxu0 %v1264
    %1772 = vmatprep.subr.mxu0 0.0
    %1773 = vmatpush1.msra.mxu0 %v1263
    %1774 = vmatprep.subr.mxu0 0.0
    %1775 = vmatpush1.msra.mxu0 %v1262
    %1776 = vmatprep.subr.mxu0 0.0
    %1777 = vmatpush2.msra.mxu0 0.0
    %1778 = vmatprep.subr.mxu0 0.0
    %1779 = vmatpush2.msra.mxu0 0.0
    %1780 = vmatprep.subr.mxu0 0.0
    %1781 = vmatpush2.msra.mxu0 0.0
    %1782 = vmatprep.subr.mxu0 0.0
    %1783 = vmatpush2.msra.mxu0 0.0
    %1784 = vmatprep.subr.mxu0 0.0
    %1785 = vmatpush2.msra.mxu0 0.0
    %1786 = vmatprep.subr.mxu0 0.0
    %1787 = vmatpush2.msra.mxu0 0.0
    %1788 = vmatprep.subr.mxu0 0.0
    %1789 = vmatpush2.msra.mxu0 0.0
    %1790 = vmatprep.subr.mxu0 0.0
    %1791 = vmatpush2.msra.mxu0 0.0
    %1792 = vmatprep.subr.mxu0 0.0
    %1793 = vmatpush2.msra.mxu0 0.0
    %1794 = vmatprep.subr.mxu0 0.0
    %1795 = vmatpush2.msra.mxu0 0.0
    %1796 = vmatprep.subr.mxu0 0.0
    %1797 = vmatpush2.msra.mxu0 0.0
    %1798 = vmatprep.subr.mxu0 0.0
    %1799 = vmatpush2.msra.mxu0 0.0
    %1800 = vmatprep.subr.mxu0 0.0
    %1801 = vmatpush2.msra.mxu0 0.0
    %1802 = vmatprep.subr.mxu0 0.0
    %1803 = vmatpush2.msra.mxu0 0.0
    %1804 = vmatprep.subr.mxu0 0.0
    %1805 = vmatpush2.msra.mxu0 0.0
    %1806 = vmatprep.subr.mxu0 0.0
    %1807 = vmatpush2.msra.mxu0 0.0
    %1808 = vmatprep.mubr.f32.mxu0 0.0
    %1809 = vmatmul.mubr.f32.gmra.mxu0 %v1742
    %v1810 = vpop.f32.mrf.mxu0
    %v1811 = vadd.f32 0.0, %v1810
    %v1812 = vpop.f32.mrf.mxu0
    %1813 = vdwg.mxu0
    %v1815 = vrot.slane %v1811, 5
    %v1816 = vrot.slane %v1811, 6
    %v1819 = vadd.f32 %v1350, %v1815
    %v1820 = vadd.f32 %v1355, %v1816
    %v1821 = vtanh.pop %v1819
    %v1822 = vtanh.pop %v1820
    %v1823 = vmul.f32 %v1821, 0.5
    %v1824 = vmul.f32 %v1822, 0.5
    %v1825 = vadd.f32 %v1823, 0.5
    %v1826 = vadd.f32 %v1824, 0.5
    %v1829 = vrot.slane %v1721, 7
    %v1830 = vrot.slane %v1722, 7
    %v1833 = vmul.f32 %v1825, %v1829
    %v1834 = vmul.f32 %v1826, %v1830
    %1837 = vrot.lane.b32.xlu0 %v1821, 64
    %v1838 = vpop.permute.xlu0 %1837
    %1839 = vrot.lane.b32.xlu0 %v1822, 64
    %v1840 = vpop.permute.xlu0 %1839
    %v1843 = vmul.f32 %v1825, %v1838
    %v1844 = vmul.f32 %v1826, %v1840
    %1847 = vrot.lane.b32.xlu0 %v1843, 32
    %v1848 = vpop.permute.xlu0 %1847
    %1849 = vrot.lane.b32.xlu0 %v1844, 32
    %v1850 = vpop.permute.xlu0 %1849
    %v1853 = vadd.f32 %v1833, %v1848
    %v1854 = vadd.f32 %v1834, %v1850
    %v1855 = vtanh.pop %v1853
    %v1856 = vtanh.pop %v1854
    %1859 = vrot.lane.b32.xlu0 %v1855, 64
    %v1860 = vpop.permute.xlu0 %1859
    %1861 = vrot.lane.b32.xlu0 %v1856, 64
    %v1862 = vpop.permute.xlu0 %1861
    %v1865 = vmul.f32 %v1825, %v1860
    %v1866 = vmul.f32 %v1826, %v1862
    %v1869 = vrot.slane %v1865, 3
    %v1870 = vrot.slane %v1866, 2
    %v1871 = vsel %vm319, %v1870, %v1869
    %1872 = vrot.lane.b32.xlu0 %v1871, 32
    %v1873 = vpop.permute.xlu0 %1872
    %v1874 = vsel %vm196, %v1873, 0
    %1876 = vmatprep.subr.mxu0 0.0
    %1877 = vmatpush1.msra.mxu0 0.0
    %1878 = vmatprep.subr.mxu0 0.0
    %1879 = vmatpush1.msra.mxu0 0.0
    %1880 = vmatprep.subr.mxu0 0.0
    %1881 = vmatpush1.msra.mxu0 0.0
    %1882 = vmatprep.subr.mxu0 0.0
    %1883 = vmatpush1.msra.mxu0 0.0
    %1884 = vmatprep.subr.mxu0 0.0
    %1885 = vmatpush1.msra.mxu0 0.0
    %1886 = vmatprep.subr.mxu0 0.0
    %1887 = vmatpush1.msra.mxu0 0.0
    %1888 = vmatprep.subr.mxu0 0.0
    %1889 = vmatpush1.msra.mxu0 0.0
    %1890 = vmatprep.subr.mxu0 0.0
    %1891 = vmatpush1.msra.mxu0 0.0
    %1892 = vmatprep.subr.mxu0 0.0
    %1893 = vmatpush1.msra.mxu0 0.0
    %1894 = vmatprep.subr.mxu0 0.0
    %1895 = vmatpush1.msra.mxu0 0.0
    %1896 = vmatprep.subr.mxu0 0.0
    %1897 = vmatpush1.msra.mxu0 0.0
    %1898 = vmatprep.subr.mxu0 0.0
    %1899 = vmatpush1.msra.mxu0 0.0
    %1900 = vmatprep.subr.mxu0 0.0
    %1901 = vmatpush1.msra.mxu0 %v1265
    %1902 = vmatprep.subr.mxu0 0.0
    %1903 = vmatpush1.msra.mxu0 %v1264
    %1904 = vmatprep.subr.mxu0 0.0
    %1905 = vmatpush1.msra.mxu0 %v1263
    %1906 = vmatprep.subr.mxu0 0.0
    %1907 = vmatpush1.msra.mxu0 %v1262
    %1908 = vmatprep.subr.mxu0 0.0
    %1909 = vmatpush2.msra.mxu0 0.0
    %1910 = vmatprep.subr.mxu0 0.0
    %1911 = vmatpush2.msra.mxu0 0.0
    %1912 = vmatprep.subr.mxu0 0.0
    %1913 = vmatpush2.msra.mxu0 0.0
    %1914 = vmatprep.subr.mxu0 0.0
    %1915 = vmatpush2.msra.mxu0 0.0
    %1916 = vmatprep.subr.mxu0 0.0
    %1917 = vmatpush2.msra.mxu0 0.0
    %1918 = vmatprep.subr.mxu0 0.0
    %1919 = vmatpush2.msra.mxu0 0.0
    %1920 = vmatprep.subr.mxu0 0.0
    %1921 = vmatpush2.msra.mxu0 0.0
    %1922 = vmatprep.subr.mxu0 0.0
    %1923 = vmatpush2.msra.mxu0 0.0
    %1924 = vmatprep.subr.mxu0 0.0
    %1925 = vmatpush2.msra.mxu0 0.0
    %1926 = vmatprep.subr.mxu0 0.0
    %1927 = vmatpush2.msra.mxu0 0.0
    %1928 = vmatprep.subr.mxu0 0.0
    %1929 = vmatpush2.msra.mxu0 0.0
    %1930 = vmatprep.subr.mxu0 0.0
    %1931 = vmatpush2.msra.mxu0 0.0
    %1932 = vmatprep.subr.mxu0 0.0
    %1933 = vmatpush2.msra.mxu0 0.0
    %1934 = vmatprep.subr.mxu0 0.0
    %1935 = vmatpush2.msra.mxu0 0.0
    %1936 = vmatprep.subr.mxu0 0.0
    %1937 = vmatpush2.msra.mxu0 0.0
    %1938 = vmatprep.subr.mxu0 0.0
    %1939 = vmatpush2.msra.mxu0 0.0
    %1940 = vmatprep.mubr.f32.mxu0 0.0
    %1941 = vmatmul.mubr.f32.gmra.mxu0 %v1874
    %v1942 = vpop.f32.mrf.mxu0
    %v1943 = vadd.f32 0.0, %v1942
    %v1944 = vpop.f32.mrf.mxu0
    %1945 = vdwg.mxu0
    %v1947 = vrot.slane %v1943, 4
    %v1948 = vrot.slane %v1943, 5
    %v1951 = vadd.f32 %v1350, %v1947
    %v1952 = vadd.f32 %v1355, %v1948
    %v1953 = vtanh.pop %v1951
    %v1954 = vtanh.pop %v1952
    %v1955 = vmul.f32 %v1953, 0.5
    %v1956 = vmul.f32 %v1954, 0.5
    %v1957 = vadd.f32 %v1955, 0.5
    %v1958 = vadd.f32 %v1956, 0.5
    %v1961 = vrot.slane %v1853, 7
    %v1962 = vrot.slane %v1854, 7
    %v1965 = vmul.f32 %v1957, %v1961
    %v1966 = vmul.f32 %v1958, %v1962
    %1969 = vrot.lane.b32.xlu0 %v1953, 64
    %v1970 = vpop.permute.xlu0 %1969
    %1971 = vrot.lane.b32.xlu0 %v1954, 64
    %v1972 = vpop.permute.xlu0 %1971
    %v1975 = vmul.f32 %v1957, %v1970
    %v1976 = vmul.f32 %v1958, %v1972
    %1979 = vrot.lane.b32.xlu0 %v1975, 32
    %v1980 = vpop.permute.xlu0 %1979
    %1981 = vrot.lane.b32.xlu0 %v1976, 32
    %v1982 = vpop.permute.xlu0 %1981
    %v1985 = vadd.f32 %v1965, %v1980
    %v1986 = vadd.f32 %v1966, %v1982
    %v1987 = vtanh.pop %v1985
    %v1988 = vtanh.pop %v1986
    %1991 = vrot.lane.b32.xlu0 %v1987, 64
    %v1992 = vpop.permute.xlu0 %1991
    %1993 = vrot.lane.b32.xlu0 %v1988, 64
    %v1994 = vpop.permute.xlu0 %1993
    %v1997 = vmul.f32 %v1957, %v1992
    %v1998 = vmul.f32 %v1958, %v1994
    %v2001 = vrot.slane %v1997, 4
    %v2002 = vrot.slane %v1998, 3
    %v2003 = vsel %vm319, %v2002, %v2001
    %2004 = vrot.lane.b32.xlu0 %v2003, 32
    %v2005 = vpop.permute.xlu0 %2004
    %v2006 = vsel %vm196, %v2005, 0
    %2008 = vmatprep.subr.mxu0 0.0
    %2009 = vmatpush1.msra.mxu0 0.0
    %2010 = vmatprep.subr.mxu0 0.0
    %2011 = vmatpush1.msra.mxu0 0.0
    %2012 = vmatprep.subr.mxu0 0.0
    %2013 = vmatpush1.msra.mxu0 0.0
    %2014 = vmatprep.subr.mxu0 0.0
    %2015 = vmatpush1.msra.mxu0 0.0
    %2016 = vmatprep.subr.mxu0 0.0
    %2017 = vmatpush1.msra.mxu0 0.0
    %2018 = vmatprep.subr.mxu0 0.0
    %2019 = vmatpush1.msra.mxu0 0.0
    %2020 = vmatprep.subr.mxu0 0.0
    %2021 = vmatpush1.msra.mxu0 0.0
    %2022 = vmatprep.subr.mxu0 0.0
    %2023 = vmatpush1.msra.mxu0 0.0
    %2024 = vmatprep.subr.mxu0 0.0
    %2025 = vmatpush1.msra.mxu0 0.0
    %2026 = vmatprep.subr.mxu0 0.0
    %2027 = vmatpush1.msra.mxu0 0.0
    %2028 = vmatprep.subr.mxu0 0.0
    %2029 = vmatpush1.msra.mxu0 0.0
    %2030 = vmatprep.subr.mxu0 0.0
    %2031 = vmatpush1.msra.mxu0 0.0
    %2032 = vmatprep.subr.mxu0 0.0
    %2033 = vmatpush1.msra.mxu0 %v1265
    %2034 = vmatprep.subr.mxu0 0.0
    %2035 = vmatpush1.msra.mxu0 %v1264
    %2036 = vmatprep.subr.mxu0 0.0
    %2037 = vmatpush1.msra.mxu0 %v1263
    %2038 = vmatprep.subr.mxu0 0.0
    %2039 = vmatpush1.msra.mxu0 %v1262
    %2040 = vmatprep.subr.mxu0 0.0
    %2041 = vmatpush2.msra.mxu0 0.0
    %2042 = vmatprep.subr.mxu0 0.0
    %2043 = vmatpush2.msra.mxu0 0.0
    %2044 = vmatprep.subr.mxu0 0.0
    %2045 = vmatpush2.msra.mxu0 0.0
    %2046 = vmatprep.subr.mxu0 0.0
    %2047 = vmatpush2.msra.mxu0 0.0
    %2048 = vmatprep.subr.mxu0 0.0
    %2049 = vmatpush2.msra.mxu0 0.0
    %2050 = vmatprep.subr.mxu0 0.0
    %2051 = vmatpush2.msra.mxu0 0.0
    %2052 = vmatprep.subr.mxu0 0.0
    %2053 = vmatpush2.msra.mxu0 0.0
    %2054 = vmatprep.subr.mxu0 0.0
    %2055 = vmatpush2.msra.mxu0 0.0
    %2056 = vmatprep.subr.mxu0 0.0
    %2057 = vmatpush2.msra.mxu0 0.0
    %2058 = vmatprep.subr.mxu0 0.0
    %2059 = vmatpush2.msra.mxu0 0.0
    %2060 = vmatprep.subr.mxu0 0.0
    %2061 = vmatpush2.msra.mxu0 0.0
    %2062 = vmatprep.subr.mxu0 0.0
    %2063 = vmatpush2.msra.mxu0 0.0
    %2064 = vmatprep.subr.mxu0 0.0
    %2065 = vmatpush2.msra.mxu0 0.0
    %2066 = vmatprep.subr.mxu0 0.0
    %2067 = vmatpush2.msra.mxu0 0.0
    %2068 = vmatprep.subr.mxu0 0.0
    %2069 = vmatpush2.msra.mxu0 0.0
    %2070 = vmatprep.subr.mxu0 0.0
    %2071 = vmatpush2.msra.mxu0 0.0
    %2072 = vmatprep.mubr.f32.mxu0 0.0
    %2073 = vmatmul.mubr.f32.gmra.mxu0 %v2006
    %v2074 = vpop.f32.mrf.mxu0
    %v2075 = vadd.f32 0.0, %v2074
    %v2076 = vpop.f32.mrf.mxu0
    %2077 = vdwg.mxu0
    %v2079 = vrot.slane %v2075, 3
    %v2080 = vrot.slane %v2075, 4
    %v2083 = vadd.f32 %v1350, %v2079
    %v2084 = vadd.f32 %v1355, %v2080
    %v2085 = vtanh.pop %v2083
    %v2086 = vtanh.pop %v2084
    %v2087 = vmul.f32 %v2085, 0.5
    %v2088 = vmul.f32 %v2086, 0.5
    %v2089 = vadd.f32 %v2087, 0.5
    %v2090 = vadd.f32 %v2088, 0.5
    %v2093 = vrot.slane %v1985, 7
    %v2094 = vrot.slane %v1986, 7
    %v2097 = vmul.f32 %v2089, %v2093
    %v2098 = vmul.f32 %v2090, %v2094
    %2101 = vrot.lane.b32.xlu0 %v2085, 64
    %v2102 = vpop.permute.xlu0 %2101
    %2103 = vrot.lane.b32.xlu0 %v2086, 64
    %v2104 = vpop.permute.xlu0 %2103
    %v2107 = vmul.f32 %v2089, %v2102
    %v2108 = vmul.f32 %v2090, %v2104
    %2111 = vrot.lane.b32.xlu0 %v2107, 32
    %v2112 = vpop.permute.xlu0 %2111
    %2113 = vrot.lane.b32.xlu0 %v2108, 32
    %v2114 = vpop.permute.xlu0 %2113
    %v2117 = vadd.f32 %v2097, %v2112
    %v2118 = vadd.f32 %v2098, %v2114
    %v2119 = vtanh.pop %v2117
    %v2120 = vtanh.pop %v2118
    %2123 = vrot.lane.b32.xlu0 %v2119, 64
    %v2124 = vpop.permute.xlu0 %2123
    %2125 = vrot.lane.b32.xlu0 %v2120, 64
    %v2126 = vpop.permute.xlu0 %2125
    %v2129 = vmul.f32 %v2089, %v2124
    %v2130 = vmul.f32 %v2090, %v2126
    %v2133 = vrot.slane %v2129, 5
    %v2134 = vrot.slane %v2130, 4
    %v2135 = vsel %vm319, %v2134, %v2133
    %2136 = vrot.lane.b32.xlu0 %v2135, 32
    %v2137 = vpop.permute.xlu0 %2136
    %v2138 = vsel %vm196, %v2137, 0
    %2140 = vmatprep.subr.mxu0 0.0
    %2141 = vmatpush1.msra.mxu0 0.0
    %2142 = vmatprep.subr.mxu0 0.0
    %2143 = vmatpush1.msra.mxu0 0.0
    %2144 = vmatprep.subr.mxu0 0.0
    %2145 = vmatpush1.msra.mxu0 0.0
    %2146 = vmatprep.subr.mxu0 0.0
    %2147 = vmatpush1.msra.mxu0 0.0
    %2148 = vmatprep.subr.mxu0 0.0
    %2149 = vmatpush1.msra.mxu0 0.0
    %2150 = vmatprep.subr.mxu0 0.0
    %2151 = vmatpush1.msra.mxu0 0.0
    %2152 = vmatprep.subr.mxu0 0.0
    %2153 = vmatpush1.msra.mxu0 0.0
    %2154 = vmatprep.subr.mxu0 0.0
    %2155 = vmatpush1.msra.mxu0 0.0
    %2156 = vmatprep.subr.mxu0 0.0
    %2157 = vmatpush1.msra.mxu0 0.0
    %2158 = vmatprep.subr.mxu0 0.0
    %2159 = vmatpush1.msra.mxu0 0.0
    %2160 = vmatprep.subr.mxu0 0.0
    %2161 = vmatpush1.msra.mxu0 0.0
    %2162 = vmatprep.subr.mxu0 0.0
    %2163 = vmatpush1.msra.mxu0 0.0
    %2164 = vmatprep.subr.mxu0 0.0
    %2165 = vmatpush1.msra.mxu0 %v1265
    %2166 = vmatprep.subr.mxu0 0.0
    %2167 = vmatpush1.msra.mxu0 %v1264
    %2168 = vmatprep.subr.mxu0 0.0
    %2169 = vmatpush1.msra.mxu0 %v1263
    %2170 = vmatprep.subr.mxu0 0.0
    %2171 = vmatpush1.msra.mxu0 %v1262
    %2172 = vmatprep.subr.mxu0 0.0
    %2173 = vmatpush2.msra.mxu0 0.0
    %2174 = vmatprep.subr.mxu0 0.0
    %2175 = vmatpush2.msra.mxu0 0.0
    %2176 = vmatprep.subr.mxu0 0.0
    %2177 = vmatpush2.msra.mxu0 0.0
    %2178 = vmatprep.subr.mxu0 0.0
    %2179 = vmatpush2.msra.mxu0 0.0
    %2180 = vmatprep.subr.mxu0 0.0
    %2181 = vmatpush2.msra.mxu0 0.0
    %2182 = vmatprep.subr.mxu0 0.0
    %2183 = vmatpush2.msra.mxu0 0.0
    %2184 = vmatprep.subr.mxu0 0.0
    %2185 = vmatpush2.msra.mxu0 0.0
    %2186 = vmatprep.subr.mxu0 0.0
    %2187 = vmatpush2.msra.mxu0 0.0
    %2188 = vmatprep.subr.mxu0 0.0
    %2189 = vmatpush2.msra.mxu0 0.0
    %2190 = vmatprep.subr.mxu0 0.0
    %2191 = vmatpush2.msra.mxu0 0.0
    %2192 = vmatprep.subr.mxu0 0.0
    %2193 = vmatpush2.msra.mxu0 0.0
    %2194 = vmatprep.subr.mxu0 0.0
    %2195 = vmatpush2.msra.mxu0 0.0
    %2196 = vmatprep.subr.mxu0 0.0
    %2197 = vmatpush2.msra.mxu0 0.0
    %2198 = vmatprep.subr.mxu0 0.0
    %2199 = vmatpush2.msra.mxu0 0.0
    %2200 = vmatprep.subr.mxu0 0.0
    %2201 = vmatpush2.msra.mxu0 0.0
    %2202 = vmatprep.subr.mxu0 0.0
    %2203 = vmatpush2.msra.mxu0 0.0
    %2204 = vmatprep.mubr.f32.mxu0 0.0
    %2205 = vmatmul.mubr.f32.gmra.mxu0 %v2138
    %v2206 = vpop.f32.mrf.mxu0
    %v2207 = vadd.f32 0.0, %v2206
    %v2208 = vpop.f32.mrf.mxu0
    %2209 = vdwg.mxu0
    %v2211 = vrot.slane %v2207, 2
    %v2212 = vrot.slane %v2207, 3
    %v2215 = vadd.f32 %v1350, %v2211
    %v2216 = vadd.f32 %v1355, %v2212
    %v2217 = vtanh.pop %v2215
    %v2218 = vtanh.pop %v2216
    %v2219 = vmul.f32 %v2217, 0.5
    %v2220 = vmul.f32 %v2218, 0.5
    %v2221 = vadd.f32 %v2219, 0.5
    %v2222 = vadd.f32 %v2220, 0.5
    %v2225 = vrot.slane %v2117, 7
    %v2226 = vrot.slane %v2118, 7
    %v2229 = vmul.f32 %v2221, %v2225
    %v2230 = vmul.f32 %v2222, %v2226
    %2233 = vrot.lane.b32.xlu0 %v2217, 64
    %v2234 = vpop.permute.xlu0 %2233
    %2235 = vrot.lane.b32.xlu0 %v2218, 64
    %v2236 = vpop.permute.xlu0 %2235
    %v2239 = vmul.f32 %v2221, %v2234
    %v2240 = vmul.f32 %v2222, %v2236
    %2243 = vrot.lane.b32.xlu0 %v2239, 32
    %v2244 = vpop.permute.xlu0 %2243
    %2245 = vrot.lane.b32.xlu0 %v2240, 32
    %v2246 = vpop.permute.xlu0 %2245
    %v2249 = vadd.f32 %v2229, %v2244
    %v2250 = vadd.f32 %v2230, %v2246
    %v2251 = vtanh.pop %v2249
    %v2252 = vtanh.pop %v2250
    %2255 = vrot.lane.b32.xlu0 %v2251, 64
    %v2256 = vpop.permute.xlu0 %2255
    %2257 = vrot.lane.b32.xlu0 %v2252, 64
    %v2258 = vpop.permute.xlu0 %2257
    %v2261 = vmul.f32 %v2221, %v2256
    %v2262 = vmul.f32 %v2222, %v2258
    %v2265 = vrot.slane %v2261, 6
    %v2266 = vrot.slane %v2262, 5
    %v2267 = vsel %vm319, %v2266, %v2265
    %2268 = vrot.lane.b32.xlu0 %v2267, 32
    %v2269 = vpop.permute.xlu0 %2268
    %v2270 = vsel %vm196, %v2269, 0
    %2272 = vmatprep.subr.mxu0 0.0
    %2273 = vmatpush1.msra.mxu0 0.0
    %2274 = vmatprep.subr.mxu0 0.0
    %2275 = vmatpush1.msra.mxu0 0.0
    %2276 = vmatprep.subr.mxu0 0.0
    %2277 = vmatpush1.msra.mxu0 0.0
    %2278 = vmatprep.subr.mxu0 0.0
    %2279 = vmatpush1.msra.mxu0 0.0
    %2280 = vmatprep.subr.mxu0 0.0
    %2281 = vmatpush1.msra.mxu0 0.0
    %2282 = vmatprep.subr.mxu0 0.0
    %2283 = vmatpush1.msra.mxu0 0.0
    %2284 = vmatprep.subr.mxu0 0.0
    %2285 = vmatpush1.msra.mxu0 0.0
    %2286 = vmatprep.subr.mxu0 0.0
    %2287 = vmatpush1.msra.mxu0 0.0
    %2288 = vmatprep.subr.mxu0 0.0
    %2289 = vmatpush1.msra.mxu0 0.0
    %2290 = vmatprep.subr.mxu0 0.0
    %2291 = vmatpush1.msra.mxu0 0.0
    %2292 = vmatprep.subr.mxu0 0.0
    %2293 = vmatpush1.msra.mxu0 0.0
    %2294 = vmatprep.subr.mxu0 0.0
    %2295 = vmatpush1.msra.mxu0 0.0
    %2296 = vmatprep.subr.mxu0 0.0
    %2297 = vmatpush1.msra.mxu0 %v1265
    %2298 = vmatprep.subr.mxu0 0.0
    %2299 = vmatpush1.msra.mxu0 %v1264
    %2300 = vmatprep.subr.mxu0 0.0
    %2301 = vmatpush1.msra.mxu0 %v1263
    %2302 = vmatprep.subr.mxu0 0.0
    %2303 = vmatpush1.msra.mxu0 %v1262
    %2304 = vmatprep.subr.mxu0 0.0
    %2305 = vmatpush2.msra.mxu0 0.0
    %2306 = vmatprep.subr.mxu0 0.0
    %2307 = vmatpush2.msra.mxu0 0.0
    %2308 = vmatprep.subr.mxu0 0.0
    %2309 = vmatpush2.msra.mxu0 0.0
    %2310 = vmatprep.subr.mxu0 0.0
    %2311 = vmatpush2.msra.mxu0 0.0
    %2312 = vmatprep.subr.mxu0 0.0
    %2313 = vmatpush2.msra.mxu0 0.0
    %2314 = vmatprep.subr.mxu0 0.0
    %2315 = vmatpush2.msra.mxu0 0.0
    %2316 = vmatprep.subr.mxu0 0.0
    %2317 = vmatpush2.msra.mxu0 0.0
    %2318 = vmatprep.subr.mxu0 0.0
    %2319 = vmatpush2.msra.mxu0 0.0
    %2320 = vmatprep.subr.mxu0 0.0
    %2321 = vmatpush2.msra.mxu0 0.0
    %2322 = vmatprep.subr.mxu0 0.0
    %2323 = vmatpush2.msra.mxu0 0.0
    %2324 = vmatprep.subr.mxu0 0.0
    %2325 = vmatpush2.msra.mxu0 0.0
    %2326 = vmatprep.subr.mxu0 0.0
    %2327 = vmatpush2.msra.mxu0 0.0
    %2328 = vmatprep.subr.mxu0 0.0
    %2329 = vmatpush2.msra.mxu0 0.0
    %2330 = vmatprep.subr.mxu0 0.0
    %2331 = vmatpush2.msra.mxu0 0.0
    %2332 = vmatprep.subr.mxu0 0.0
    %2333 = vmatpush2.msra.mxu0 0.0
    %2334 = vmatprep.subr.mxu0 0.0
    %2335 = vmatpush2.msra.mxu0 0.0
    %2336 = vmatprep.mubr.f32.mxu0 0.0
    %2337 = vmatmul.mubr.f32.gmra.mxu0 %v2270
    %v2338 = vpop.f32.mrf.mxu0
    %v2339 = vadd.f32 0.0, %v2338
    %v2340 = vpop.f32.mrf.mxu0
    %2341 = vdwg.mxu0
    %v2343 = vrot.slane %v2339, 1
    %v2344 = vrot.slane %v2339, 2
    %v2347 = vadd.f32 %v1350, %v2343
    %v2348 = vadd.f32 %v1355, %v2344
    %v2349 = vtanh.pop %v2347
    %v2350 = vtanh.pop %v2348
    %v2351 = vmul.f32 %v2349, 0.5
    %v2352 = vmul.f32 %v2350, 0.5
    %v2353 = vadd.f32 %v2351, 0.5
    %v2354 = vadd.f32 %v2352, 0.5
    %v2357 = vrot.slane %v2249, 7
    %v2358 = vrot.slane %v2250, 7
    %v2361 = vmul.f32 %v2353, %v2357
    %v2362 = vmul.f32 %v2354, %v2358
    %2365 = vrot.lane.b32.xlu0 %v2349, 64
    %v2366 = vpop.permute.xlu0 %2365
    %2367 = vrot.lane.b32.xlu0 %v2350, 64
    %v2368 = vpop.permute.xlu0 %2367
    %v2371 = vmul.f32 %v2353, %v2366
    %v2372 = vmul.f32 %v2354, %v2368
    %2375 = vrot.lane.b32.xlu0 %v2371, 32
    %v2376 = vpop.permute.xlu0 %2375
    %2377 = vrot.lane.b32.xlu0 %v2372, 32
    %v2378 = vpop.permute.xlu0 %2377
    %v2381 = vadd.f32 %v2361, %v2376
    %v2382 = vadd.f32 %v2362, %v2378
    %v2383 = vtanh.pop %v2381
    %v2384 = vtanh.pop %v2382
    %2387 = vrot.lane.b32.xlu0 %v2383, 64
    %v2388 = vpop.permute.xlu0 %2387
    %2389 = vrot.lane.b32.xlu0 %v2384, 64
    %v2390 = vpop.permute.xlu0 %2389
    %v2393 = vmul.f32 %v2353, %v2388
    %v2394 = vmul.f32 %v2354, %v2390
    %v2395 = vsel %vm1238, %v1472, %v1602
    %v2396 = vsel %vm1238, %v1473, %v1603
    %v2397 = vsel %vm1241, %v2395, %v1733
    %v2398 = vsel %vm1241, %v2396, %v1734
    %v2399 = vsel %vm1244, %v2397, %v1865
    %v2400 = vsel %vm1244, %v2398, %v1866
    %v2401 = vsel %vm117, %v2399, %v1997
    %v2402 = vsel %vm117, %v2400, %v1998
    %v2403 = vsel %vm1249, %v2401, %v2129
    %v2404 = vsel %vm1249, %v2402, %v2130
    %v2405 = vsel %vm1252, %v2403, %v2261
    %v2406 = vsel %vm1252, %v2404, %v2262
    %v2407 = vsel %vm1255, %v2405, %v2393
    %v2408 = vsel %vm1255, %v2406, %v2394
    %v2409 = vld [vmem:[%s7] sm:$0xff]
    %v2410 = vld [vmem:[%s7 + $0x8] sm:$0xff]
    %v2411 = vld [vmem:[%s7 + $0x10] sm:$0xff]
    %v2412 = vld [vmem:[%s7 + $0x18] sm:$0xff]
    %v2413 = vld [vmem:[%s8] sm:$0x1]
    %v2415 = vlaneseq
    %v2416 = vshrl.u32 %v2415, 7
    %v2417 = vsub.s32 0, %v2416
    %v2418 = vrot.slane %v2413, %v2417
    %2422 = vrot.lane.b32.xlu0 %v2407, 32
    %v2423 = vpop.permute.xlu0 %2422
    %2424 = vrot.lane.b32.xlu0 %v2408, 32
    %v2425 = vpop.permute.xlu0 %2424
    %v2426 = vsel %vm196, %v2423, 0
    %v2428 = vsel %vm196, %v2425, 0
    %2430 = vmatprep.subr.mxu0 0.0
    %2431 = vmatpush1.msra.mxu0 0.0
    %2432 = vmatprep.subr.mxu0 0.0
    %2433 = vmatpush1.msra.mxu0 0.0
    %2434 = vmatprep.subr.mxu0 0.0
    %2435 = vmatpush1.msra.mxu0 0.0
    %2436 = vmatprep.subr.mxu0 0.0
    %2437 = vmatpush1.msra.mxu0 0.0
    %2438 = vmatprep.subr.mxu0 0.0
    %2439 = vmatpush1.msra.mxu0 0.0
    %2440 = vmatprep.subr.mxu0 0.0
    %2441 = vmatpush1.msra.mxu0 0.0
    %2442 = vmatprep.subr.mxu0 0.0
    %2443 = vmatpush1.msra.mxu0 0.0
    %2444 = vmatprep.subr.mxu0 0.0
    %2445 = vmatpush1.msra.mxu0 0.0
    %2446 = vmatprep.subr.mxu0 0.0
    %2447 = vmatpush1.msra.mxu0 0.0
    %2448 = vmatprep.subr.mxu0 0.0
    %2449 = vmatpush1.msra.mxu0 0.0
    %2450 = vmatprep.subr.mxu0 0.0
    %2451 = vmatpush1.msra.mxu0 0.0
    %2452 = vmatprep.subr.mxu0 0.0
    %2453 = vmatpush1.msra.mxu0 0.0
    %2454 = vmatprep.subr.mxu0 0.0
    %2455 = vmatpush1.msra.mxu0 %v2412
    %2456 = vmatprep.subr.mxu0 0.0
    %2457 = vmatpush1.msra.mxu0 %v2411
    %2458 = vmatprep.subr.mxu0 0.0
    %2459 = vmatpush1.msra.mxu0 %v2410
    %2460 = vmatprep.subr.mxu0 0.0
    %2461 = vmatpush1.msra.mxu0 %v2409
    %2462 = vmatprep.subr.mxu0 0.0
    %2463 = vmatpush2.msra.mxu0 0.0
    %2464 = vmatprep.subr.mxu0 0.0
    %2465 = vmatpush2.msra.mxu0 0.0
    %2466 = vmatprep.subr.mxu0 0.0
    %2467 = vmatpush2.msra.mxu0 0.0
    %2468 = vmatprep.subr.mxu0 0.0
    %2469 = vmatpush2.msra.mxu0 0.0
    %2470 = vmatprep.subr.mxu0 0.0
    %2471 = vmatpush2.msra.mxu0 0.0
    %2472 = vmatprep.subr.mxu0 0.0
    %2473 = vmatpush2.msra.mxu0 0.0
    %2474 = vmatprep.subr.mxu0 0.0
    %2475 = vmatpush2.msra.mxu0 0.0
    %2476 = vmatprep.subr.mxu0 0.0
    %2477 = vmatpush2.msra.mxu0 0.0
    %2478 = vmatprep.subr.mxu0 0.0
    %2479 = vmatpush2.msra.mxu0 0.0
    %2480 = vmatprep.subr.mxu0 0.0
    %2481 = vmatpush2.msra.mxu0 0.0
    %2482 = vmatprep.subr.mxu0 0.0
    %2483 = vmatpush2.msra.mxu0 0.0
    %2484 = vmatprep.subr.mxu0 0.0
    %2485 = vmatpush2.msra.mxu0 0.0
    %2486 = vmatprep.subr.mxu0 0.0
    %2487 = vmatpush2.msra.mxu0 0.0
    %2488 = vmatprep.subr.mxu0 0.0
    %2489 = vmatpush2.msra.mxu0 0.0
    %2490 = vmatprep.subr.mxu0 0.0
    %2491 = vmatpush2.msra.mxu0 0.0
    %2492 = vmatprep.subr.mxu0 0.0
    %2493 = vmatpush2.msra.mxu0 0.0
    %2494 = vmatprep.mubr.f32.mxu0 0.0
    %2495 = vmatmul.mubr.f32.gmra.mxu0 %v2426
    %v2496 = vpop.f32.mrf.mxu0
    %v2497 = vadd.f32 %v2418, %v2496
    %v2498 = vpop.f32.mrf.mxu0
    %2499 = vmatprep.mubr.f32.mxu0 0.0
    %2500 = vmatmul.mubr.f32.gmra.mxu0 %v2428
    %v2501 = vpop.f32.mrf.mxu0
    %v2502 = vadd.f32 %v2418, %v2501
    %v2503 = vpop.f32.mrf.mxu0
    %2504 = vdwg.mxu0
    %2505 = vst.msk [vmem:[%s9] sm:$0xff] %vm110, %v2497
    %2506 = vst.msk [vmem:[%s9 + $0x8] sm:$0xff] %vm110, %v2502
    // Predicated region
    $region58: #{lstm_model.1} parent=1 // pred_check
      _
    $region59: #{lstm_model.1} parent=1 // pred_check_branch
      %2508 = sbr.rel (0) target = $region61
    $region60: #{lstm_model.1} parent=1 // pred_region
      _
    $region61: #{lstm_model.1} parent=1 // pred_fallthru
      _
    // Predicated region
    $region62: #{lstm_model.1} parent=1 // pred_check
      _
    $region63: #{lstm_model.1} parent=1 // pred_check_branch
      %2510 = sbr.rel (0) target = $region65
    $region64: #{lstm_model.1} parent=1 // pred_region
      _
    $region65: #{lstm_model.1} parent=1 // pred_fallthru
      _
    %2511 = vsyncpa [#allocation3], 1
    %2512 = vsyncpa [#allocation5], 1
    %2513 = vsyncpa [#allocation8], 1

</llo_original>
